<compile_context>
chip_gen: v5e
topology: v5e:2x2
jax: 0.10.0
libtpu: 0.0.40
codegen_flags: <defaults>
</compile_context>

<pallas_src>
import jax
import jax.numpy as jnp
from jax import lax
from jax.experimental import pallas as pl
from jax.experimental.pallas import tpu as pltpu


def deepfm_kernel(x_ref,
                  w1_ref, b1_ref,
                  w2_ref, b2_ref,
                  w3_ref, b3_ref,
                  w4_ref, b4_ref,
                  out_ref):
    x_bf = x_ref[...]                                    # (TB, IN) bf16
    x = x_bf.astype(jnp.float32)                         # f32 copy for FM / VPU

    # ---- Deep part: 3 hidden layers (ReLU) + linear head ----
    h = jnp.dot(x_bf, w1_ref[...], preferred_element_type=jnp.float32) + b1_ref[...]
    h = jnp.maximum(h, 0.0)
    h = jnp.dot(h.astype(jnp.bfloat16), w2_ref[...],
                preferred_element_type=jnp.float32) + b2_ref[...]
    h = jnp.maximum(h, 0.0)
    h = jnp.dot(h.astype(jnp.bfloat16), w3_ref[...],
                preferred_element_type=jnp.float32) + b3_ref[...]
    h = jnp.maximum(h, 0.0)
    # Final (Hp, 1) layer as a VPU multiply + lane reduce (no N=1 MXU matmul).
    deep = jnp.sum(h * w4_ref[...], axis=1, keepdims=True) + b4_ref[0, 0]  # (TB,1)

    # ---- FM part on the flat 2D combined input (exactly as in the PyTorch
    #      reference, which reduces dim=1 of combined_in):
    #      0.5 * ((sum_j x_j)^2 - sum_j x_j^2) per row ----
    s = jnp.sum(x, axis=1, keepdims=True)                # (TB, 1)
    ss = jnp.sum(x * x, axis=1, keepdims=True)           # (TB, 1)
    fm = 0.5 * (s * s - ss)                              # (TB, 1)

    # Direct (TB, 1) store; output traffic is ~1% of the x stream, so the
    # narrow store is negligible and needs no transpose gymnastics.
    out_ref[...] = jax.nn.sigmoid(deep + fm)


def _round_up(x, m):
    return ((x + m - 1) // m) * m


def _choose_tb(batch, tb_max=1024):
    """Batch tile: multiple of 128, as large as possible up to tb_max, capped
    so the grid keeps >= 2 steps (v7x megacore) whenever the batch allows."""
    b128 = _round_up(batch, 128)
    if b128 <= 128:
        return 128
    return max(128, min(tb_max, _round_up((batch + 1) // 2, 128)))


def deepfm_forward(combined_in, params, *, tb=None):
    """combined_in: (B, IN) float.  params: padded MLP weights/biases (f32)."""
    B, IN = combined_in.shape
    Hp = params["w1"].shape[1]
    if tb is None:
        tb = _choose_tb(B)
    assert tb % 128 == 0

    # Pad batch to a multiple of the tile; extra rows are zeros and sliced off.
    B_pad = _round_up(B, tb)
    x = combined_in.astype(jnp.bfloat16)
    if B_pad != B:
        x = jnp.pad(x, ((0, B_pad - B), (0, 0)))

    # Hidden-layer weights streamed as bf16 (resident across the grid).
    w1 = params["w1"].astype(jnp.bfloat16)
    w2 = params["w2"].astype(jnp.bfloat16)
    w3 = params["w3"].astype(jnp.bfloat16)

    grid = (B_pad // tb,)

    flops = 2 * B_pad * (IN * Hp + 2 * Hp * Hp + Hp) + 6 * B_pad * IN
    bytes_accessed = (B_pad * IN * 2                     # x stream (bf16)
                      + 2 * (IN * Hp + 2 * Hp * Hp)      # bf16 weights
                      + 4 * (4 * Hp + 1)                 # f32 biases + w4 row
                      + 4 * B_pad)                       # output

    out = pl.pallas_call(
        deepfm_kernel,
        out_shape=jax.ShapeDtypeStruct((B_pad, 1), jnp.float32),
        grid=grid,
        in_specs=[
            pl.BlockSpec((tb, IN), lambda i: (i, 0)),     # x: batch-tiled stream
            pl.BlockSpec((IN, Hp), lambda i: (0, 0)),     # w1 (resident)
            pl.BlockSpec((1, Hp), lambda i: (0, 0)),      # b1
            pl.BlockSpec((Hp, Hp), lambda i: (0, 0)),     # w2
            pl.BlockSpec((1, Hp), lambda i: (0, 0)),      # b2
            pl.BlockSpec((Hp, Hp), lambda i: (0, 0)),     # w3
            pl.BlockSpec((1, Hp), lambda i: (0, 0)),      # b3
            pl.BlockSpec((1, Hp), lambda i: (0, 0)),      # w4 as a row (VPU path)
            pl.BlockSpec(memory_space=pltpu.MemorySpace.SMEM),  # b4 scalar
        ],
        out_specs=pl.BlockSpec((tb, 1), lambda i: (i, 0)),
        compiler_params=pltpu.CompilerParams(
            dimension_semantics=("parallel",),
            vmem_limit_bytes=32 * 1024 * 1024,
        ),
        cost_estimate=pl.CostEstimate(
            flops=flops, transcendentals=B_pad, bytes_accessed=bytes_accessed),
    )(x, w1, params["b1"], w2, params["b2"], w3, params["b3"],
      params["w4_row"], params["b4"])

    return out[:B, 0]                                    # (B,)


def build_params(key, user_vocab, item_vocab, vocab_sizes, embedding_dim):
    """Deterministic synthetic parameters matching the module's shapes.

    Hidden dim is zero-padded to a multiple of 128 (semantics-preserving)."""
    F = len(vocab_sizes)
    IN = (F + 2) * embedding_dim
    H = embedding_dim
    Hp = ((H + 127) // 128) * 128
    keys = jax.random.split(key, 8 + 2 + F)

    def dense(k, fan_in, shape):
        bound = 1.0 / float(fan_in) ** 0.5
        return jax.random.uniform(k, shape, jnp.float32, -bound, bound)

    w1 = dense(keys[0], IN, (IN, H)); b1 = dense(keys[1], IN, (1, H))
    w2 = dense(keys[2], H, (H, H));   b2 = dense(keys[3], H, (1, H))
    w3 = dense(keys[4], H, (H, H));   b3 = dense(keys[5], H, (1, H))
    w4 = dense(keys[6], H, (H, 1));   b4 = dense(keys[7], H, (1, 1))

    params = {
        "w1": jnp.zeros((IN, Hp), jnp.float32).at[:, :H].set(w1),
        "b1": jnp.zeros((1, Hp), jnp.float32).at[:, :H].set(b1),
        "w2": jnp.zeros((Hp, Hp), jnp.float32).at[:H, :H].set(w2),
        "b2": jnp.zeros((1, Hp), jnp.float32).at[:, :H].set(b2),
        "w3": jnp.zeros((Hp, Hp), jnp.float32).at[:H, :H].set(w3),
        "b3": jnp.zeros((1, Hp), jnp.float32).at[:, :H].set(b3),
        "w4_row": jnp.zeros((1, Hp), jnp.float32).at[:, :H].set(w4[:, 0][None, :]),
        "b4": b4,
    }
    emb = {
        "user": jax.random.normal(keys[8], (user_vocab, embedding_dim), jnp.float32) * 0.1,
        "item": jax.random.normal(keys[9], (item_vocab, embedding_dim), jnp.float32) * 0.1,
        "sparse": [
            jax.random.normal(keys[10 + i], (vocab_sizes[i], embedding_dim), jnp.float32) * 0.1
            for i in range(F)
        ],
    }
    return params, emb


def deepfm_apply(user_ids, item_ids, sparse_features, params, emb):
    # Embedding lookups (glue, plain JAX).
    # TODO(synk): fuse these gathers into the Pallas kernel via pl.ANY tables
    #             + scalar-prefetched ids so combined_in never hits HBM.
    user_e = jnp.take(emb["user"], user_ids, axis=0)
    item_e = jnp.take(emb["item"], item_ids, axis=0)
    if user_ids.ndim > 1:
        user_e = jnp.sum(user_e, axis=-2)
        item_e = jnp.sum(item_e, axis=-2)
    sparse_e = jnp.concatenate(
        [jnp.take(emb["sparse"][i], sparse_features[:, i], axis=0)
         for i in range(sparse_features.shape[-1])],
        axis=-1)
    combined_in = jnp.concatenate([user_e, item_e, sparse_e], axis=-1).astype(jnp.float32)
    return deepfm_forward(combined_in, params)


def _reference(combined_in, params):
    """Pure-JAX reference mirroring the kernel's bf16 quantization points."""
    f32 = jnp.float32
    hp = lax.Precision.HIGHEST
    x = combined_in.astype(jnp.bfloat16).astype(f32)
    w1 = params["w1"].astype(jnp.bfloat16).astype(f32)
    w2 = params["w2"].astype(jnp.bfloat16).astype(f32)
    w3 = params["w3"].astype(jnp.bfloat16).astype(f32)

    h = jnp.maximum(jnp.dot(x, w1, precision=hp) + params["b1"], 0.0)
    h = h.astype(jnp.bfloat16).astype(f32)
    h = jnp.maximum(jnp.dot(h, w2, precision=hp) + params["b2"], 0.0)
    h = h.astype(jnp.bfloat16).astype(f32)
    h = jnp.maximum(jnp.dot(h, w3, precision=hp) + params["b3"], 0.0)
    deep = jnp.sum(h * params["w4_row"], axis=1) + params["b4"][0, 0]

    s = jnp.sum(x, axis=1)
    ss = jnp.sum(x * x, axis=1)
    fm = 0.5 * (s * s - ss)
    return jax.nn.sigmoid(deep + fm)


if __name__ == "__main__":
    key = jax.random.PRNGKey(0)
    user_vocab, item_vocab = 50, 60
    vocab_sizes = [10, 12, 14, 16]          # 4 sparse features
    embedding_dim = 32                      # IN = (4 + 2) * 32 = 192
    B = 500                                 # non-multiple of tile; tb=256 -> 2 grid steps

    params, emb = build_params(key, user_vocab, item_vocab, vocab_sizes, embedding_dim)

    k1, k2, k3 = jax.random.split(jax.random.PRNGKey(0), 3)
    user_ids = jax.random.randint(k1, (B,), 0, user_vocab)
    item_ids = jax.random.randint(k2, (B,), 0, item_vocab)
    sparse_features = jnp.stack(
        [jax.random.randint(jax.random.fold_in(k3, i), (B,), 0, vocab_sizes[i])
         for i in range(len(vocab_sizes))], axis=1)

    out = deepfm_apply(user_ids, item_ids, sparse_features, params, emb)
    out = jax.block_until_ready(out)

    # Cross-check against pure-JAX reference.
    user_e = jnp.take(emb["user"], user_ids, axis=0)
    item_e = jnp.take(emb["item"], item_ids, axis=0)
    sparse_e = jnp.concatenate(
        [jnp.take(emb["sparse"][i], sparse_features[:, i], axis=0)
         for i in range(sparse_features.shape[-1])], axis=-1)
    combined_in = jnp.concatenate([user_e, item_e, sparse_e], axis=-1)
    ref = _reference(combined_in, params)

    assert out.shape == (B,)
    assert jnp.allclose(out, ref, atol=2e-4, rtol=2e-4), (
        float(jnp.max(jnp.abs(out - ref))))

    print("KERNEL_OK")
</pallas_src>

<mosaic_0001>
module attributes {stable_mosaic.version = 11 : i64} {
  func.func @deepfm_kernel(%arg0: i32, %arg1: memref<256x192xbf16, #tpu.memory_space<vmem>>, %arg2: memref<192x128xbf16, #tpu.memory_space<vmem>>, %arg3: memref<1x128xf32, #tpu.memory_space<vmem>>, %arg4: memref<128x128xbf16, #tpu.memory_space<vmem>>, %arg5: memref<1x128xf32, #tpu.memory_space<vmem>>, %arg6: memref<128x128xbf16, #tpu.memory_space<vmem>>, %arg7: memref<1x128xf32, #tpu.memory_space<vmem>>, %arg8: memref<1x128xf32, #tpu.memory_space<vmem>>, %arg9: memref<1x1xf32, #tpu.memory_space<smem>>, %arg10: memref<256x1xf32, #tpu.memory_space<vmem>>) attributes {dimension_semantics = [#tpu.dimension_semantics<parallel>], iteration_bounds = array<i64: 2>, scalar_prefetch = 0 : i64, scratch_operands = 0 : i64, tpu.core_type = #tpu.core_type<tc>, window_params = [{transform_indices = @transform_0, window_bounds = array<i64: 256, 192>}, {pipeline_mode = #tpu.pipeline_mode<synchronous>, transform_indices = @transform_1, window_bounds = array<i64: 192, 128>}, {pipeline_mode = #tpu.pipeline_mode<synchronous>, transform_indices = @transform_2, window_bounds = array<i64: 1, 128>}, {pipeline_mode = #tpu.pipeline_mode<synchronous>, transform_indices = @transform_3, window_bounds = array<i64: 128, 128>}, {pipeline_mode = #tpu.pipeline_mode<synchronous>, transform_indices = @transform_4, window_bounds = array<i64: 1, 128>}, {pipeline_mode = #tpu.pipeline_mode<synchronous>, transform_indices = @transform_5, window_bounds = array<i64: 128, 128>}, {pipeline_mode = #tpu.pipeline_mode<synchronous>, transform_indices = @transform_6, window_bounds = array<i64: 1, 128>}, {pipeline_mode = #tpu.pipeline_mode<synchronous>, transform_indices = @transform_7, window_bounds = array<i64: 1, 128>}, {transform_indices = @transform_8, window_bounds = array<i64: 1, 1>}, {transform_indices = @transform_9, window_bounds = array<i64: 256, 1>}]} {
    %c0 = arith.constant 0 : index
    %c0_0 = arith.constant 0 : index
    %0 = vector.load %arg1[%c0, %c0_0] : memref<256x192xbf16, #tpu.memory_space<vmem>>, vector<256x192xbf16>
    %1 = arith.extf %0 : vector<256x192xbf16> to vector<256x192xf32>
    %c0_1 = arith.constant 0 : index
    %c0_2 = arith.constant 0 : index
    %2 = vector.load %arg2[%c0_1, %c0_2] : memref<192x128xbf16, #tpu.memory_space<vmem>>, vector<192x128xbf16>
    %cst = arith.constant dense<0.000000e+00> : vector<256x128xf32>
    %3 = tpu.matmul %0, %2, %cst {dimension_numbers = #tpu.dot_dimension_numbers<[1], [0], [0], [1], [0, 0, 1, 1], [], []>} : vector<256x192xbf16>, vector<192x128xbf16>, vector<256x128xf32> -> vector<256x128xf32>
    %c0_3 = arith.constant 0 : index
    %c0_4 = arith.constant 0 : index
    %4 = vector.load %arg3[%c0_3, %c0_4] : memref<1x128xf32, #tpu.memory_space<vmem>>, vector<1x128xf32>
    %5 = vector.broadcast %4 : vector<1x128xf32> to vector<256x128xf32>
    %6 = arith.addf %3, %5 : vector<256x128xf32>
    %cst_5 = arith.constant 0.000000e+00 : f32
    %7 = vector.broadcast %cst_5 : f32 to vector<256x128xf32>
    %8 = arith.maximumf %6, %7 : vector<256x128xf32>
    %9 = arith.truncf %8 : vector<256x128xf32> to vector<256x128xbf16>
    %c0_6 = arith.constant 0 : index
    %c0_7 = arith.constant 0 : index
    %10 = vector.load %arg4[%c0_6, %c0_7] : memref<128x128xbf16, #tpu.memory_space<vmem>>, vector<128x128xbf16>
    %cst_8 = arith.constant dense<0.000000e+00> : vector<256x128xf32>
    %11 = tpu.matmul %9, %10, %cst_8 {dimension_numbers = #tpu.dot_dimension_numbers<[1], [0], [0], [1], [0, 0, 1, 1], [], []>} : vector<256x128xbf16>, vector<128x128xbf16>, vector<256x128xf32> -> vector<256x128xf32>
    %c0_9 = arith.constant 0 : index
    %c0_10 = arith.constant 0 : index
    %12 = vector.load %arg5[%c0_9, %c0_10] : memref<1x128xf32, #tpu.memory_space<vmem>>, vector<1x128xf32>
    %13 = vector.broadcast %12 : vector<1x128xf32> to vector<256x128xf32>
    %14 = arith.addf %11, %13 : vector<256x128xf32>
    %cst_11 = arith.constant 0.000000e+00 : f32
    %15 = vector.broadcast %cst_11 : f32 to vector<256x128xf32>
    %16 = arith.maximumf %14, %15 : vector<256x128xf32>
    %17 = arith.truncf %16 : vector<256x128xf32> to vector<256x128xbf16>
    %c0_12 = arith.constant 0 : index
    %c0_13 = arith.constant 0 : index
    %18 = vector.load %arg6[%c0_12, %c0_13] : memref<128x128xbf16, #tpu.memory_space<vmem>>, vector<128x128xbf16>
    %cst_14 = arith.constant dense<0.000000e+00> : vector<256x128xf32>
    %19 = tpu.matmul %17, %18, %cst_14 {dimension_numbers = #tpu.dot_dimension_numbers<[1], [0], [0], [1], [0, 0, 1, 1], [], []>} : vector<256x128xbf16>, vector<128x128xbf16>, vector<256x128xf32> -> vector<256x128xf32>
    %c0_15 = arith.constant 0 : index
    %c0_16 = arith.constant 0 : index
    %20 = vector.load %arg7[%c0_15, %c0_16] : memref<1x128xf32, #tpu.memory_space<vmem>>, vector<1x128xf32>
    %21 = vector.broadcast %20 : vector<1x128xf32> to vector<256x128xf32>
    %22 = arith.addf %19, %21 : vector<256x128xf32>
    %cst_17 = arith.constant 0.000000e+00 : f32
    %23 = vector.broadcast %cst_17 : f32 to vector<256x128xf32>
    %24 = arith.maximumf %22, %23 : vector<256x128xf32>
    %c0_18 = arith.constant 0 : index
    %c0_19 = arith.constant 0 : index
    %25 = vector.load %arg8[%c0_18, %c0_19] : memref<1x128xf32, #tpu.memory_space<vmem>>, vector<1x128xf32>
    %26 = vector.broadcast %25 : vector<1x128xf32> to vector<256x128xf32>
    %27 = arith.mulf %24, %26 : vector<256x128xf32>
    %cst_20 = arith.constant dense<0.000000e+00> : vector<256xf32>
    %28 = vector.multi_reduction <add>, %27, %cst_20 [1] : vector<256x128xf32> to vector<256xf32>
    %29 = vector.shape_cast %28 : vector<256xf32> to vector<256x1xf32>
    %c0_21 = arith.constant 0 : index
    %c0_22 = arith.constant 0 : index
    %30 = memref.load %arg9[%c0_21, %c0_22] : memref<1x1xf32, #tpu.memory_space<smem>>
    %31 = vector.broadcast %30 : f32 to vector<256x1xf32>
    %32 = arith.addf %29, %31 : vector<256x1xf32>
    %cst_23 = arith.constant dense<0.000000e+00> : vector<256xf32>
    %33 = vector.multi_reduction <add>, %1, %cst_23 [1] : vector<256x192xf32> to vector<256xf32>
    %34 = vector.shape_cast %33 : vector<256xf32> to vector<256x1xf32>
    %35 = arith.mulf %1, %1 : vector<256x192xf32>
    %cst_24 = arith.constant dense<0.000000e+00> : vector<256xf32>
    %36 = vector.multi_reduction <add>, %35, %cst_24 [1] : vector<256x192xf32> to vector<256xf32>
    %37 = vector.shape_cast %36 : vector<256xf32> to vector<256x1xf32>
    %38 = arith.mulf %34, %34 : vector<256x1xf32>
    %39 = arith.subf %38, %37 : vector<256x1xf32>
    %cst_25 = arith.constant 5.000000e-01 : f32
    %40 = vector.broadcast %cst_25 : f32 to vector<256x1xf32>
    %41 = arith.mulf %40, %39 : vector<256x1xf32>
    %42 = arith.addf %32, %41 : vector<256x1xf32>
    %43 = arith.negf %42 : vector<256x1xf32>
    %44 = math.exp %43 : vector<256x1xf32>
    %cst_26 = arith.constant 1.000000e+00 : f32
    %45 = vector.broadcast %cst_26 : f32 to vector<256x1xf32>
    %46 = arith.addf %45, %44 : vector<256x1xf32>
    %47 = arith.divf %45, %46 : vector<256x1xf32>
    %c0_27 = arith.constant 0 : index
    %c0_28 = arith.constant 0 : index
    %48 = vector.load %arg10[%c0_27, %c0_28] : memref<256x1xf32, #tpu.memory_space<vmem>>, vector<256x1xf32>
    tpu.vector_store %arg10[%c0_27, %c0_28], %47 {strides = array<i32>} : memref<256x1xf32, #tpu.memory_space<vmem>>, vector<256x1xf32>,
    return
  }
  func.func @transform_0(%arg0: i32) -> (i32, i32) {
    %c0_i32 = arith.constant 0 : i32
    %c0_i32_0 = arith.constant 0 : i32
    return %arg0, %c0_i32 : i32, i32
  }
  func.func @transform_1(%arg0: i32) -> (i32, i32) {
    %c0_i32 = arith.constant 0 : i32
    %c0_i32_0 = arith.constant 0 : i32
    %c0_i32_1 = arith.constant 0 : i32
    return %c0_i32, %c0_i32_0 : i32, i32
  }
  func.func @transform_2(%arg0: i32) -> (i32, i32) {
    %c0_i32 = arith.constant 0 : i32
    %c0_i32_0 = arith.constant 0 : i32
    %c0_i32_1 = arith.constant 0 : i32
    return %c0_i32, %c0_i32_0 : i32, i32
  }
  func.func @transform_3(%arg0: i32) -> (i32, i32) {
    %c0_i32 = arith.constant 0 : i32
    %c0_i32_0 = arith.constant 0 : i32
    %c0_i32_1 = arith.constant 0 : i32
    return %c0_i32, %c0_i32_0 : i32, i32
  }
  func.func @transform_4(%arg0: i32) -> (i32, i32) {
    %c0_i32 = arith.constant 0 : i32
    %c0_i32_0 = arith.constant 0 : i32
    %c0_i32_1 = arith.constant 0 : i32
    return %c0_i32, %c0_i32_0 : i32, i32
  }
  func.func @transform_5(%arg0: i32) -> (i32, i32) {
    %c0_i32 = arith.constant 0 : i32
    %c0_i32_0 = arith.constant 0 : i32
    %c0_i32_1 = arith.constant 0 : i32
    return %c0_i32, %c0_i32_0 : i32, i32
  }
  func.func @transform_6(%arg0: i32) -> (i32, i32) {
    %c0_i32 = arith.constant 0 : i32
    %c0_i32_0 = arith.constant 0 : i32
    %c0_i32_1 = arith.constant 0 : i32
    return %c0_i32, %c0_i32_0 : i32, i32
  }
  func.func @transform_7(%arg0: i32) -> (i32, i32) {
    %c0_i32 = arith.constant 0 : i32
    %c0_i32_0 = arith.constant 0 : i32
    %c0_i32_1 = arith.constant 0 : i32
    return %c0_i32, %c0_i32_0 : i32, i32
  }
  func.func @transform_8(%arg0: i32) -> (i32, i32) {
    %c0_i32 = arith.constant 0 : i32
    %c0_i32_0 = arith.constant 0 : i32
    %c0_i32_1 = arith.constant 0 : i32
    return %c0_i32, %c0_i32_0 : i32, i32
  }
  func.func @transform_9(%arg0: i32) -> (i32, i32) {
    %c0_i32 = arith.constant 0 : i32
    %c0_i32_0 = arith.constant 0 : i32
    return %arg0, %c0_i32 : i32, i32
  }
}

</mosaic_0001>

<llo_original>
// kernel: tpu_custom_call.1
$region0: #{tpu_custom_call.1}
  #allocation0 [shape = 'u32[]', space=smem, size = 0x4, offset = 0x4, fixed_abs, tag = 'smem constant byte address 0x4 - core index']
  #allocation1 [shape = 'u32[72,128]{1,0:T(1,128)}', space=vmem, size = 0x9000, scoped, tag = 'internal scratch']
  #allocation2 [shape = 'f32[1,1]{1,0:T(1,128)S(6)}', space=smem, size = 0x200, scoped, tag = 'scoped memory for tpu_custom_call.1']
  %s0 = inlined_call_operand.vmem [shape: bf16[512,192], index: 0, kind: input, shape index: {}]
  %s1 = inlined_call_operand.vmem [shape: bf16[192,128], index: 1, kind: input, shape index: {}]
  %s2 = inlined_call_operand.vmem [shape: f32[1,128], index: 2, kind: input, shape index: {}]
  %s3 = inlined_call_operand.vmem [shape: bf16[128,128], index: 3, kind: input, shape index: {}]
  %s4 = inlined_call_operand.vmem [shape: f32[1,128], index: 4, kind: input, shape index: {}]
  %s5 = inlined_call_operand.vmem [shape: bf16[128,128], index: 5, kind: input, shape index: {}]
  %s6 = inlined_call_operand.vmem [shape: f32[1,128], index: 6, kind: input, shape index: {}]
  %s7 = inlined_call_operand.vmem [shape: f32[1,128], index: 7, kind: input, shape index: {}]
  %s8 = inlined_call_operand.<no memory space> [shape: f32[1,1], index: 8, kind: input, shape index: {}]
  %s9 = inlined_call_operand.vmem [shape: f32[512,1], index: 9, kind: output, shape index: {}]
  %s10 = sld [smem:[#allocation0]]
  $region69: #{tpu_custom_call.1} parent=0
    _
  %s12 = ssub.s32 1, %s10
  %s13 = scalar_select 0, %s12, %s10
  %14 = sst [smem:[#allocation2]] %s8
  loop: start=0, step=1, limit=4
  $region2: #{tpu_custom_call.1} parent=0 // loop_pre_header
    _
  $region3: #{tpu_custom_call.1} parent=0 // loop_header
    %s16 = sphi 0, %s20
    %p17 = scmp.ge.s32.totalorder %s16, 4
    %s26 = sphi 0, %s28
    %s29 = sphi 0, %s26
    %s30 = sphi 0, %s29
    %s46 = sphi 0, %s30
    %s50 = sphi 0, %s50
    %s52 = sphi 0, %s50
    %s53 = sphi 0, %s52
    %s67 = sphi 0, %s53
    %s71 = sphi 0, %s71
    %s73 = sphi 0, %s71
    %s74 = sphi 0, %s73
    %s88 = sphi 0, %s74
    %s92 = sphi 0, %s92
    %s94 = sphi 0, %s92
    %s95 = sphi 0, %s94
    %s109 = sphi 0, %s95
    %s113 = sphi 0, %s113
    %s115 = sphi 0, %s113
    %s116 = sphi 0, %s115
    %s130 = sphi 0, %s116
    %s134 = sphi 0, %s134
    %s136 = sphi 0, %s134
    %s137 = sphi 0, %s136
    %s151 = sphi 0, %s137
    %s155 = sphi 0, %s155
    %s157 = sphi 0, %s155
    %s158 = sphi 0, %s157
    %s172 = sphi 0, %s158
    %s176 = sphi 0, %s176
    %s178 = sphi 0, %s176
    %s179 = sphi 0, %s178
    %s193 = sphi 0, %s179
    %s197 = sphi 0, %s197
    %s199 = sphi 0, %s197
    %s200 = sphi 0, %s199
    %s214 = sphi 0, %s200
    %s220 = sphi 0, %s222
    %s223 = sphi 0, %s220
    %s224 = sphi 0, %s223
    %s240 = sphi 0, %s224
  $region4: #{tpu_custom_call.1} parent=0 // loop_header_branch
    %19 = sbr.rel (%p17) target = $region8
  $region5: #{tpu_custom_call.1} parent=0 // loop_body
    %s21 = ssub.s32 %s16, 1
    %s22 = ssub.s32 %s16, 2
    %s23 = sadd.s32 %s16, 1
    %s24 = ssub.s32 %s16, %s23
    %p25 = scmp.eq.s32.totalorder %s24, 0
    %s27 = sadd.s32 %s26, 1
    %s28 = scalar_select %p25, %s26, %s27
    %p31 = pneg %p25
    %p32 = scmp.eq.s32.totalorder %s16, 1
    %p33 = por %p31, %p32
    %p34 = scmp.ne.s32.totalorder %s26, %s29
    %p35 = scmp.eq.s32.totalorder %s16, 0
    %p36 = por %p34, %p35
    %p37 = scmp.ne.s32.totalorder %s26, %s29
    %p38 = scmp.eq.s32.totalorder %s21, 1
    %p39 = por %p37, %p38
    %p40 = scmp.ne.s32.totalorder %s29, %s30
    %p41 = scmp.eq.s32.totalorder %s21, 0
    %p42 = por %p40, %p41
    %p43 = scmp.ne.s32.totalorder %s29, %s30
    %p44 = scmp.eq.s32.totalorder %s22, 1
    %p45 = por %p43, %p44
    %p47 = scmp.ne.s32.totalorder %s30, %s46
    %p48 = scmp.eq.s32.totalorder %s22, 0
    %p49 = por %p47, %p48
    %s51 = sadd.s32 %s50, 1
    %p54 = scmp.eq.s32.totalorder %s16, 1
    %p55 = scmp.ne.s32.totalorder %s50, %s52
    %p56 = scmp.eq.s32.totalorder %s16, 0
    %p57 = por %p55, %p56
    %p58 = scmp.ne.s32.totalorder %s50, %s52
    %p59 = scmp.eq.s32.totalorder %s21, 1
    %p60 = por %p58, %p59
    %p61 = scmp.ne.s32.totalorder %s52, %s53
    %p62 = scmp.eq.s32.totalorder %s21, 0
    %p63 = por %p61, %p62
    %p64 = scmp.ne.s32.totalorder %s52, %s53
    %p65 = scmp.eq.s32.totalorder %s22, 1
    %p66 = por %p64, %p65
    %p68 = scmp.ne.s32.totalorder %s53, %s67
    %p69 = scmp.eq.s32.totalorder %s22, 0
    %p70 = por %p68, %p69
    %s72 = sadd.s32 %s71, 1
    %p75 = scmp.eq.s32.totalorder %s16, 1
    %p76 = scmp.ne.s32.totalorder %s71, %s73
    %p77 = scmp.eq.s32.totalorder %s16, 0
    %p78 = por %p76, %p77
    %p79 = scmp.ne.s32.totalorder %s71, %s73
    %p80 = scmp.eq.s32.totalorder %s21, 1
    %p81 = por %p79, %p80
    %p82 = scmp.ne.s32.totalorder %s73, %s74
    %p83 = scmp.eq.s32.totalorder %s21, 0
    %p84 = por %p82, %p83
    %p85 = scmp.ne.s32.totalorder %s73, %s74
    %p86 = scmp.eq.s32.totalorder %s22, 1
    %p87 = por %p85, %p86
    %p89 = scmp.ne.s32.totalorder %s74, %s88
    %p90 = scmp.eq.s32.totalorder %s22, 0
    %p91 = por %p89, %p90
    %s93 = sadd.s32 %s92, 1
    %p96 = scmp.eq.s32.totalorder %s16, 1
    %p97 = scmp.ne.s32.totalorder %s92, %s94
    %p98 = scmp.eq.s32.totalorder %s16, 0
    %p99 = por %p97, %p98
    %p100 = scmp.ne.s32.totalorder %s92, %s94
    %p101 = scmp.eq.s32.totalorder %s21, 1
    %p102 = por %p100, %p101
    %p103 = scmp.ne.s32.totalorder %s94, %s95
    %p104 = scmp.eq.s32.totalorder %s21, 0
    %p105 = por %p103, %p104
    %p106 = scmp.ne.s32.totalorder %s94, %s95
    %p107 = scmp.eq.s32.totalorder %s22, 1
    %p108 = por %p106, %p107
    %p110 = scmp.ne.s32.totalorder %s95, %s109
    %p111 = scmp.eq.s32.totalorder %s22, 0
    %p112 = por %p110, %p111
    %s114 = sadd.s32 %s113, 1
    %p117 = scmp.eq.s32.totalorder %s16, 1
    %p118 = scmp.ne.s32.totalorder %s113, %s115
    %p119 = scmp.eq.s32.totalorder %s16, 0
    %p120 = por %p118, %p119
    %p121 = scmp.ne.s32.totalorder %s113, %s115
    %p122 = scmp.eq.s32.totalorder %s21, 1
    %p123 = por %p121, %p122
    %p124 = scmp.ne.s32.totalorder %s115, %s116
    %p125 = scmp.eq.s32.totalorder %s21, 0
    %p126 = por %p124, %p125
    %p127 = scmp.ne.s32.totalorder %s115, %s116
    %p128 = scmp.eq.s32.totalorder %s22, 1
    %p129 = por %p127, %p128
    %p131 = scmp.ne.s32.totalorder %s116, %s130
    %p132 = scmp.eq.s32.totalorder %s22, 0
    %p133 = por %p131, %p132
    %s135 = sadd.s32 %s134, 1
    %p138 = scmp.eq.s32.totalorder %s16, 1
    %p139 = scmp.ne.s32.totalorder %s134, %s136
    %p140 = scmp.eq.s32.totalorder %s16, 0
    %p141 = por %p139, %p140
    %p142 = scmp.ne.s32.totalorder %s134, %s136
    %p143 = scmp.eq.s32.totalorder %s21, 1
    %p144 = por %p142, %p143
    %p145 = scmp.ne.s32.totalorder %s136, %s137
    %p146 = scmp.eq.s32.totalorder %s21, 0
    %p147 = por %p145, %p146
    %p148 = scmp.ne.s32.totalorder %s136, %s137
    %p149 = scmp.eq.s32.totalorder %s22, 1
    %p150 = por %p148, %p149
    %p152 = scmp.ne.s32.totalorder %s137, %s151
    %p153 = scmp.eq.s32.totalorder %s22, 0
    %p154 = por %p152, %p153
    %s156 = sadd.s32 %s155, 1
    %p159 = scmp.eq.s32.totalorder %s16, 1
    %p160 = scmp.ne.s32.totalorder %s155, %s157
    %p161 = scmp.eq.s32.totalorder %s16, 0
    %p162 = por %p160, %p161
    %p163 = scmp.ne.s32.totalorder %s155, %s157
    %p164 = scmp.eq.s32.totalorder %s21, 1
    %p165 = por %p163, %p164
    %p166 = scmp.ne.s32.totalorder %s157, %s158
    %p167 = scmp.eq.s32.totalorder %s21, 0
    %p168 = por %p166, %p167
    %p169 = scmp.ne.s32.totalorder %s157, %s158
    %p170 = scmp.eq.s32.totalorder %s22, 1
    %p171 = por %p169, %p170
    %p173 = scmp.ne.s32.totalorder %s158, %s172
    %p174 = scmp.eq.s32.totalorder %s22, 0
    %p175 = por %p173, %p174
    %s177 = sadd.s32 %s176, 1
    %p180 = scmp.eq.s32.totalorder %s16, 1
    %p181 = scmp.ne.s32.totalorder %s176, %s178
    %p182 = scmp.eq.s32.totalorder %s16, 0
    %p183 = por %p181, %p182
    %p184 = scmp.ne.s32.totalorder %s176, %s178
    %p185 = scmp.eq.s32.totalorder %s21, 1
    %p186 = por %p184, %p185
    %p187 = scmp.ne.s32.totalorder %s178, %s179
    %p188 = scmp.eq.s32.totalorder %s21, 0
    %p189 = por %p187, %p188
    %p190 = scmp.ne.s32.totalorder %s178, %s179
    %p191 = scmp.eq.s32.totalorder %s22, 1
    %p192 = por %p190, %p191
    %p194 = scmp.ne.s32.totalorder %s179, %s193
    %p195 = scmp.eq.s32.totalorder %s22, 0
    %p196 = por %p194, %p195
    %s198 = sadd.s32 %s197, 1
    %p201 = scmp.eq.s32.totalorder %s16, 1
    %p202 = scmp.ne.s32.totalorder %s197, %s199
    %p203 = scmp.eq.s32.totalorder %s16, 0
    %p204 = por %p202, %p203
    %p205 = scmp.ne.s32.totalorder %s197, %s199
    %p206 = scmp.eq.s32.totalorder %s21, 1
    %p207 = por %p205, %p206
    %p208 = scmp.ne.s32.totalorder %s199, %s200
    %p209 = scmp.eq.s32.totalorder %s21, 0
    %p210 = por %p208, %p209
    %p211 = scmp.ne.s32.totalorder %s199, %s200
    %p212 = scmp.eq.s32.totalorder %s22, 1
    %p213 = por %p211, %p212
    %p215 = scmp.ne.s32.totalorder %s200, %s214
    %p216 = scmp.eq.s32.totalorder %s22, 0
    %p217 = por %p215, %p216
    %s218 = ssub.s32 %s16, %s23
    %p219 = scmp.eq.s32.totalorder %s218, 0
    %s221 = sadd.s32 %s220, 1
    %s222 = scalar_select %p219, %s220, %s221
    %p225 = pneg %p219
    %p226 = scmp.eq.s32.totalorder %s16, 1
    %p227 = por %p225, %p226
    %p228 = scmp.ne.s32.totalorder %s220, %s223
    %p229 = scmp.eq.s32.totalorder %s16, 0
    %p230 = por %p228, %p229
    %p231 = scmp.ne.s32.totalorder %s220, %s223
    %p232 = scmp.eq.s32.totalorder %s21, 1
    %p233 = por %p231, %p232
    %p234 = scmp.ne.s32.totalorder %s223, %s224
    %p235 = scmp.eq.s32.totalorder %s21, 0
    %p236 = por %p234, %p235
    %p237 = scmp.ne.s32.totalorder %s223, %s224
    %p238 = scmp.eq.s32.totalorder %s22, 1
    %p239 = por %p237, %p238
    %p241 = scmp.ne.s32.totalorder %s224, %s240
    %p242 = scmp.eq.s32.totalorder %s22, 0
    %p243 = por %p241, %p242
    %p244 = scmp.le.s32.totalorder 1, %s16
    %p245 = scmp.lt.s32.totalorder %s16, 3
    %p246 = pnand %p244, %p245
    %p247 = pneg %p246
    // Predicated region
    $region9: #{tpu_custom_call.1} parent=5 // pred_check
      _
    $region10: #{tpu_custom_call.1} parent=5 // pred_check_branch
      %249 = sbr.rel (%p246) target = $region12
    $region11: #{tpu_custom_call.1} parent=5 // pred_region
      %s250 = ssub.s32 %s16, 1
      // Predicated region
      $region13: #{tpu_custom_call.1} parent=11 // pred_check
        %p251 = pneg %p63
      $region14: #{tpu_custom_call.1} parent=11 // pred_check_branch
        %253 = sbr.rel (%p251) target = $region16
      $region15: #{tpu_custom_call.1} parent=11 // pred_region
        _
      $region16: #{tpu_custom_call.1} parent=11 // pred_fallthru
        _
      // Predicated region
      $region17: #{tpu_custom_call.1} parent=11 // pred_check
        %p254 = pneg %p84
      $region18: #{tpu_custom_call.1} parent=11 // pred_check_branch
        %256 = sbr.rel (%p254) target = $region20
      $region19: #{tpu_custom_call.1} parent=11 // pred_region
        _
      $region20: #{tpu_custom_call.1} parent=11 // pred_fallthru
        _
      // Predicated region
      $region21: #{tpu_custom_call.1} parent=11 // pred_check
        %p257 = pneg %p105
      $region22: #{tpu_custom_call.1} parent=11 // pred_check_branch
        %259 = sbr.rel (%p257) target = $region24
      $region23: #{tpu_custom_call.1} parent=11 // pred_region
        _
      $region24: #{tpu_custom_call.1} parent=11 // pred_fallthru
        _
      // Predicated region
      $region25: #{tpu_custom_call.1} parent=11 // pred_check
        %p260 = pneg %p126
      $region26: #{tpu_custom_call.1} parent=11 // pred_check_branch
        %262 = sbr.rel (%p260) target = $region28
      $region27: #{tpu_custom_call.1} parent=11 // pred_region
        _
      $region28: #{tpu_custom_call.1} parent=11 // pred_fallthru
        _
      // Predicated region
      $region29: #{tpu_custom_call.1} parent=11 // pred_check
        %p263 = pneg %p147
      $region30: #{tpu_custom_call.1} parent=11 // pred_check_branch
        %265 = sbr.rel (%p263) target = $region32
      $region31: #{tpu_custom_call.1} parent=11 // pred_region
        _
      $region32: #{tpu_custom_call.1} parent=11 // pred_fallthru
        _
      // Predicated region
      $region33: #{tpu_custom_call.1} parent=11 // pred_check
        %p266 = pneg %p168
      $region34: #{tpu_custom_call.1} parent=11 // pred_check_branch
        %268 = sbr.rel (%p266) target = $region36
      $region35: #{tpu_custom_call.1} parent=11 // pred_region
        _
      $region36: #{tpu_custom_call.1} parent=11 // pred_fallthru
        _
      // Predicated region
      $region37: #{tpu_custom_call.1} parent=11 // pred_check
        %p269 = pneg %p189
      $region38: #{tpu_custom_call.1} parent=11 // pred_check_branch
        %271 = sbr.rel (%p269) target = $region40
      $region39: #{tpu_custom_call.1} parent=11 // pred_region
        _
      $region40: #{tpu_custom_call.1} parent=11 // pred_fallthru
        _
      // Predicated region
      $region41: #{tpu_custom_call.1} parent=11 // pred_check
        %p272 = pneg %p210
      $region42: #{tpu_custom_call.1} parent=11 // pred_check_branch
        %274 = sbr.rel (%p272) target = $region44
      $region43: #{tpu_custom_call.1} parent=11 // pred_region
        _
      $region44: #{tpu_custom_call.1} parent=11 // pred_fallthru
        _
    $region12: #{tpu_custom_call.1} parent=5 // pred_fallthru
      _
    %p275 = scmp.lt.s32.totalorder %s16, 2
    // Predicated region
    $region45: #{tpu_custom_call.1} parent=5 // pred_check
      %p276 = pneg %p275
    $region46: #{tpu_custom_call.1} parent=5 // pred_check_branch
      %278 = sbr.rel (%p276) target = $region48
    $region47: #{tpu_custom_call.1} parent=5 // pred_region
      // Predicated region
      $region49: #{tpu_custom_call.1} parent=47 // pred_check
        %p279 = pneg %p36
      $region50: #{tpu_custom_call.1} parent=47 // pred_check_branch
        %281 = sbr.rel (%p279) target = $region52
      $region51: #{tpu_custom_call.1} parent=47 // pred_region
        %s282 = smul.u32 32, %s16
        %p283 = scmp.lt.s32.totalorder %s282, 63
        %s284 = scalar_select %p283, %s282, 63
        %s285 = smul.addr %s284, 2
        %s286 = smul.addr %s285, 4
        %s287 = scalar_lea.vmem %s0, %s286
        %s288 = smul.u32 32, %s16
      $region52: #{tpu_custom_call.1} parent=47 // pred_fallthru
        _
    $region48: #{tpu_custom_call.1} parent=5 // pred_fallthru
      _
    %p289 = scmp.le.s32.totalorder 1, %s16
    %p290 = scmp.lt.s32.totalorder %s16, 3
    %p291 = pnand %p289, %p290
    %p292 = pneg %p291
    // Predicated region
    $region53: #{tpu_custom_call.1} parent=5 // pred_check
      _
    $region54: #{tpu_custom_call.1} parent=5 // pred_check_branch
      %294 = sbr.rel (%p291) target = $region56
    $region55: #{tpu_custom_call.1} parent=5 // pred_region
      %s295 = ssub.s32 %s16, 1
      %s296 = smul.u32 32, %s21
      %p297 = scmp.lt.s32.totalorder %s296, 63
      %s298 = scalar_select %p297, %s296, 63
      %s299 = smul.addr %s298, 2
      %s300 = smul.addr %s299, 4
      %s301 = scalar_lea.vmem %s0, %s300
      %p302 = pneg %p42
      %p303 = pneg %p39
      %p304 = pneg %p63
      %p305 = pneg %p60
      %p306 = pneg %p84
      %p307 = pneg %p81
      %p308 = pneg %p105
      %p309 = pneg %p102
      %p310 = pneg %p126
      %p311 = pneg %p123
      %p312 = pneg %p147
      %p313 = pneg %p144
      %p314 = pneg %p168
      %p315 = pneg %p165
      %p316 = pneg %p189
      %p317 = pneg %p186
      %p318 = pneg %p210
      %p319 = pneg %p207
      %p320 = pneg %p236
      %p321 = pneg %p233
      %s322 = smul.u32 32, %s21
      %p323 = scmp.lt.s32.totalorder %s322, 63
      %s324 = scalar_select %p323, %s322, 63
      %s325 = smul.addr %s324, 8
      %s326 = scalar_lea.vmem %s9, %s325
      %s327 = smul.u32 32, %s21
      %p328 = scmp.lt.s32.totalorder %s327, 63
      %s329 = scalar_select %p328, %s327, 63
      %s330 = smul.addr %s329, 2
      %s331 = smul.addr %s330, 4
      %s332 = scalar_lea.vmem %s0, %s331
      %s333 = smul.u32 32, %s21
      %s334 = smul.u32 32, %s21
      %p335 = scmp.lt.s32.totalorder %s334, 63
      %s336 = scalar_select %p335, %s334, 63
      %s337 = smul.addr %s336, 8
      %s338 = scalar_lea.vmem %s9, %s337
      %s339 = smul.u32 32, %s21
      %v341 = vld [vmem:[%s332] sm:$0xff]
      %v342 = vld [vmem:[%s332 + $0x8] sm:$0xff]
      %v343 = vld [vmem:[%s332 + $0x10] sm:$0xff]
      %v344 = vld [vmem:[%s332 + $0x18] sm:$0xff]
      %v345 = vld [vmem:[%s332 + $0x20] sm:$0xff]
      %v346 = vld [vmem:[%s332 + $0x28] sm:$0xff]
      %v347 = vld [vmem:[%s332 + $0x30] sm:$0xff]
      %v348 = vld [vmem:[%s332 + $0x38] sm:$0xff]
      %v349 = vld [vmem:[%s332 + $0x40] sm:$0xff]
      %v350 = vld [vmem:[%s332 + $0x48] sm:$0xff]
      %v351 = vld [vmem:[%s332 + $0x50] sm:$0xff]
      %v352 = vld [vmem:[%s332 + $0x58] sm:$0xff]
      %v353 = vld [vmem:[%s332 + $0x60] sm:$0xff]
      %v354 = vld [vmem:[%s332 + $0x68] sm:$0xff]
      %v355 = vld [vmem:[%s332 + $0x70] sm:$0xff]
      %v356 = vld [vmem:[%s332 + $0x78] sm:$0xff]
      %v357 = vld [vmem:[%s332 + $0x80] sm:$0xff]
      %v358 = vld [vmem:[%s332 + $0x88] sm:$0xff]
      %v359 = vld [vmem:[%s332 + $0x90] sm:$0xff]
      %v360 = vld [vmem:[%s332 + $0x98] sm:$0xff]
      %v361 = vld [vmem:[%s332 + $0xa0] sm:$0xff]
      %v362 = vld [vmem:[%s332 + $0xa8] sm:$0xff]
      %v363 = vld [vmem:[%s332 + $0xb0] sm:$0xff]
      %v364 = vld [vmem:[%s332 + $0xb8] sm:$0xff]
      %v365 = vld [vmem:[%s332 + $0xc0] sm:$0xff]
      %v366 = vld [vmem:[%s332 + $0xc8] sm:$0xff]
      %v367 = vld [vmem:[%s332 + $0xd0] sm:$0xff]
      %v368 = vld [vmem:[%s332 + $0xd8] sm:$0xff]
      %v369 = vld [vmem:[%s332 + $0xe0] sm:$0xff]
      %v370 = vld [vmem:[%s332 + $0xe8] sm:$0xff]
      %v371 = vld [vmem:[%s332 + $0xf0] sm:$0xff]
      %v372 = vld [vmem:[%s332 + $0xf8] sm:$0xff]
      %v373 = vunpack.c.l.bf16 %v341
      %v374 = vunpack.c.h.bf16 %v341
      %v375 = vunpack.c.l.bf16 %v342
      %v376 = vunpack.c.h.bf16 %v342
      %v377 = vunpack.c.l.bf16 %v343
      %v378 = vunpack.c.h.bf16 %v343
      %v379 = vunpack.c.l.bf16 %v344
      %v380 = vunpack.c.h.bf16 %v344
      %v381 = vunpack.c.l.bf16 %v345
      %v382 = vunpack.c.h.bf16 %v345
      %v383 = vunpack.c.l.bf16 %v346
      %v384 = vunpack.c.h.bf16 %v346
      %v385 = vunpack.c.l.bf16 %v347
      %v386 = vunpack.c.h.bf16 %v347
      %v387 = vunpack.c.l.bf16 %v348
      %v388 = vunpack.c.h.bf16 %v348
      %v389 = vunpack.c.l.bf16 %v349
      %v390 = vunpack.c.h.bf16 %v349
      %v391 = vunpack.c.l.bf16 %v350
      %v392 = vunpack.c.h.bf16 %v350
      %v393 = vunpack.c.l.bf16 %v351
      %v394 = vunpack.c.h.bf16 %v351
      %v395 = vunpack.c.l.bf16 %v352
      %v396 = vunpack.c.h.bf16 %v352
      %v397 = vunpack.c.l.bf16 %v353
      %v398 = vunpack.c.h.bf16 %v353
      %v399 = vunpack.c.l.bf16 %v354
      %v400 = vunpack.c.h.bf16 %v354
      %v401 = vunpack.c.l.bf16 %v355
      %v402 = vunpack.c.h.bf16 %v355
      %v403 = vunpack.c.l.bf16 %v356
      %v404 = vunpack.c.h.bf16 %v356
      %v405 = vunpack.c.l.bf16 %v357
      %v406 = vunpack.c.h.bf16 %v357
      %v407 = vunpack.c.l.bf16 %v358
      %v408 = vunpack.c.h.bf16 %v358
      %v409 = vunpack.c.l.bf16 %v359
      %v410 = vunpack.c.h.bf16 %v359
      %v411 = vunpack.c.l.bf16 %v360
      %v412 = vunpack.c.h.bf16 %v360
      %v413 = vunpack.c.l.bf16 %v361
      %v414 = vunpack.c.h.bf16 %v361
      %v415 = vunpack.c.l.bf16 %v362
      %v416 = vunpack.c.h.bf16 %v362
      %v417 = vunpack.c.l.bf16 %v363
      %v418 = vunpack.c.h.bf16 %v363
      %v419 = vunpack.c.l.bf16 %v364
      %v420 = vunpack.c.h.bf16 %v364
      %v421 = vunpack.c.l.bf16 %v365
      %v422 = vunpack.c.h.bf16 %v365
      %v423 = vunpack.c.l.bf16 %v366
      %v424 = vunpack.c.h.bf16 %v366
      %v425 = vunpack.c.l.bf16 %v367
      %v426 = vunpack.c.h.bf16 %v367
      %v427 = vunpack.c.l.bf16 %v368
      %v428 = vunpack.c.h.bf16 %v368
      %v429 = vunpack.c.l.bf16 %v369
      %v430 = vunpack.c.h.bf16 %v369
      %v431 = vunpack.c.l.bf16 %v370
      %v432 = vunpack.c.h.bf16 %v370
      %v433 = vunpack.c.l.bf16 %v371
      %v434 = vunpack.c.h.bf16 %v371
      %v435 = vunpack.c.l.bf16 %v372
      %v436 = vunpack.c.h.bf16 %v372
      %v437 = vld [vmem:[%s1] sm:$0xf]
      %v438 = vld [vmem:[%s1 + $0x4] sm:$0xf]
      %v439 = vld [vmem:[%s1 + $0x8] sm:$0xf]
      %v440 = vld [vmem:[%s1 + $0xc] sm:$0xf]
      %v441 = vld [vmem:[%s1 + $0x10] sm:$0xf]
      %v442 = vld [vmem:[%s1 + $0x14] sm:$0xf]
      %v443 = vld [vmem:[%s1 + $0x18] sm:$0xf]
      %v444 = vld [vmem:[%s1 + $0x1c] sm:$0xf]
      %v445 = vld [vmem:[%s1 + $0x20] sm:$0xf]
      %v446 = vld [vmem:[%s1 + $0x24] sm:$0xf]
      %v447 = vld [vmem:[%s1 + $0x28] sm:$0xf]
      %v448 = vld [vmem:[%s1 + $0x2c] sm:$0xf]
      %v449 = vld [vmem:[%s1 + $0x30] sm:$0xf]
      %v450 = vld [vmem:[%s1 + $0x34] sm:$0xf]
      %v451 = vld [vmem:[%s1 + $0x38] sm:$0xf]
      %v452 = vld [vmem:[%s1 + $0x3c] sm:$0xf]
      %v453 = vld [vmem:[%s1 + $0x40] sm:$0xf]
      %v454 = vld [vmem:[%s1 + $0x44] sm:$0xf]
      %v455 = vld [vmem:[%s1 + $0x48] sm:$0xf]
      %v456 = vld [vmem:[%s1 + $0x4c] sm:$0xf]
      %v457 = vld [vmem:[%s1 + $0x50] sm:$0xf]
      %v458 = vld [vmem:[%s1 + $0x54] sm:$0xf]
      %v459 = vld [vmem:[%s1 + $0x58] sm:$0xf]
      %v460 = vld [vmem:[%s1 + $0x5c] sm:$0xf]
      %v461 = vld [vmem:[%s2] sm:$0x1]
      %v463 = vperm.slane %v461, 0
      %v497 = vunpack.c.l.b16 %v341
      %v498 = vunpack.c.h.b16 %v341
      %v499 = vunpack.c.l.b16 %v342
      %v500 = vunpack.c.h.b16 %v342
      %v501 = vunpack.c.l.b16 %v343
      %v502 = vunpack.c.h.b16 %v343
      %v503 = vunpack.c.l.b16 %v344
      %v504 = vunpack.c.h.b16 %v344
      %v505 = vunpack.c.l.b16 %v345
      %v506 = vunpack.c.h.b16 %v345
      %v507 = vunpack.c.l.b16 %v346
      %v508 = vunpack.c.h.b16 %v346
      %v509 = vunpack.c.l.b16 %v347
      %v510 = vunpack.c.h.b16 %v347
      %v511 = vunpack.c.l.b16 %v348
      %v512 = vunpack.c.h.b16 %v348
      %v513 = vunpack.c.l.b16 %v349
      %v514 = vunpack.c.h.b16 %v349
      %v515 = vunpack.c.l.b16 %v350
      %v516 = vunpack.c.h.b16 %v350
      %v517 = vunpack.c.l.b16 %v351
      %v518 = vunpack.c.h.b16 %v351
      %v519 = vunpack.c.l.b16 %v352
      %v520 = vunpack.c.h.b16 %v352
      %v521 = vunpack.c.l.b16 %v353
      %v522 = vunpack.c.h.b16 %v353
      %v523 = vunpack.c.l.b16 %v354
      %v524 = vunpack.c.h.b16 %v354
      %v525 = vunpack.c.l.b16 %v355
      %v526 = vunpack.c.h.b16 %v355
      %v527 = vunpack.c.l.b16 %v356
      %v528 = vunpack.c.h.b16 %v356
      %v529 = vunpack.c.l.b16 %v357
      %v530 = vunpack.c.h.b16 %v357
      %v531 = vunpack.c.l.b16 %v358
      %v532 = vunpack.c.h.b16 %v358
      %v533 = vunpack.c.l.b16 %v359
      %v534 = vunpack.c.h.b16 %v359
      %v535 = vunpack.c.l.b16 %v360
      %v536 = vunpack.c.h.b16 %v360
      %v537 = vunpack.c.l.b16 %v361
      %v538 = vunpack.c.h.b16 %v361
      %v539 = vunpack.c.l.b16 %v362
      %v540 = vunpack.c.h.b16 %v362
      %v541 = vunpack.c.l.b16 %v363
      %v542 = vunpack.c.h.b16 %v363
      %v543 = vunpack.c.l.b16 %v364
      %v544 = vunpack.c.h.b16 %v364
      %v545 = vunpack.c.l.b16 %v365
      %v546 = vunpack.c.h.b16 %v365
      %v547 = vunpack.c.l.b16 %v366
      %v548 = vunpack.c.h.b16 %v366
      %v549 = vunpack.c.l.b16 %v367
      %v550 = vunpack.c.h.b16 %v367
      %v551 = vunpack.c.l.b16 %v368
      %v552 = vunpack.c.h.b16 %v368
      %v553 = vunpack.c.l.b16 %v369
      %v554 = vunpack.c.h.b16 %v369
      %v555 = vunpack.c.l.b16 %v370
      %v556 = vunpack.c.h.b16 %v370
      %v557 = vunpack.c.l.b16 %v371
      %v558 = vunpack.c.h.b16 %v371
      %v559 = vunpack.c.l.b16 %v372
      %v560 = vunpack.c.h.b16 %v372
      %v561 = vpack.c.b16 %v499, %v497
      %v562 = vpack.c.b16 %v500, %v498
      %v563 = vpack.c.b16 %v503, %v501
      %v564 = vpack.c.b16 %v504, %v502
      %v565 = vpack.c.b16 %v507, %v505
      %v566 = vpack.c.b16 %v508, %v506
      %v567 = vpack.c.b16 %v511, %v509
      %v568 = vpack.c.b16 %v512, %v510
      %v569 = vpack.c.b16 %v515, %v513
      %v570 = vpack.c.b16 %v516, %v514
      %v571 = vpack.c.b16 %v519, %v517
      %v572 = vpack.c.b16 %v520, %v518
      %v573 = vpack.c.b16 %v523, %v521
      %v574 = vpack.c.b16 %v524, %v522
      %v575 = vpack.c.b16 %v527, %v525
      %v576 = vpack.c.b16 %v528, %v526
      %v577 = vpack.c.b16 %v531, %v529
      %v578 = vpack.c.b16 %v532, %v530
      %v579 = vpack.c.b16 %v535, %v533
      %v580 = vpack.c.b16 %v536, %v534
      %v581 = vpack.c.b16 %v539, %v537
      %v582 = vpack.c.b16 %v540, %v538
      %v583 = vpack.c.b16 %v543, %v541
      %v584 = vpack.c.b16 %v544, %v542
      %v585 = vpack.c.b16 %v547, %v545
      %v586 = vpack.c.b16 %v548, %v546
      %v587 = vpack.c.b16 %v551, %v549
      %v588 = vpack.c.b16 %v552, %v550
      %v589 = vpack.c.b16 %v555, %v553
      %v590 = vpack.c.b16 %v556, %v554
      %v591 = vpack.c.b16 %v559, %v557
      %v592 = vpack.c.b16 %v560, %v558
      %v633 = vunpack.c.l.b16 %v437
      %v634 = vunpack.c.l.b16 %v438
      %v635 = vunpack.c.l.b16 %v439
      %v636 = vunpack.c.l.b16 %v440
      %v637 = vunpack.c.l.b16 %v441
      %v638 = vunpack.c.l.b16 %v442
      %v639 = vunpack.c.l.b16 %v443
      %v640 = vunpack.c.l.b16 %v444
      %v641 = vunpack.c.l.b16 %v445
      %v642 = vunpack.c.l.b16 %v446
      %v643 = vunpack.c.l.b16 %v447
      %v644 = vunpack.c.l.b16 %v448
      %v645 = vunpack.c.l.b16 %v449
      %v646 = vunpack.c.l.b16 %v450
      %v647 = vunpack.c.l.b16 %v451
      %v648 = vunpack.c.l.b16 %v452
      %v649 = vunpack.c.l.b16 %v453
      %v650 = vunpack.c.l.b16 %v454
      %v651 = vunpack.c.l.b16 %v455
      %v652 = vunpack.c.l.b16 %v456
      %v653 = vunpack.c.l.b16 %v457
      %v654 = vunpack.c.l.b16 %v458
      %v655 = vunpack.c.l.b16 %v459
      %v656 = vunpack.c.l.b16 %v460
      %v657 = vpack.c.b16 %v634, %v633
      %v658 = vpack.c.b16 %v636, %v635
      %v659 = vpack.c.b16 %v638, %v637
      %v660 = vpack.c.b16 %v640, %v639
      %v661 = vpack.c.b16 %v642, %v641
      %v662 = vpack.c.b16 %v644, %v643
      %v663 = vpack.c.b16 %v646, %v645
      %v664 = vpack.c.b16 %v648, %v647
      %v665 = vpack.c.b16 %v650, %v649
      %v666 = vpack.c.b16 %v652, %v651
      %v667 = vpack.c.b16 %v654, %v653
      %v668 = vpack.c.b16 %v656, %v655
      %vm681 = vcmask 523264
      %v683 = vsel %vm681, %v562, 0
      %v686 = vsel %vm681, %v564, 0
      %v689 = vsel %vm681, %v566, 0
      %v692 = vsel %vm681, %v568, 0
      %v695 = vsel %vm681, %v570, 0
      %v698 = vsel %vm681, %v572, 0
      %v701 = vsel %vm681, %v574, 0
      %v704 = vsel %vm681, %v576, 0
      %v707 = vsel %vm681, %v578, 0
      %v710 = vsel %vm681, %v580, 0
      %v713 = vsel %vm681, %v582, 0
      %v716 = vsel %vm681, %v584, 0
      %v719 = vsel %vm681, %v586, 0
      %v722 = vsel %vm681, %v588, 0
      %v725 = vsel %vm681, %v590, 0
      %v728 = vsel %vm681, %v592, 0
      %730 = vmatpush.bf16.msra.mxu0 %v664
      %731 = vmatpush.bf16.msra.mxu0 %v663
      %732 = vmatpush.bf16.msra.mxu0 %v662
      %733 = vmatpush.bf16.msra.mxu0 %v661
      %734 = vmatpush.bf16.msra.mxu0 %v660
      %735 = vmatpush.bf16.msra.mxu0 %v659
      %736 = vmatpush.bf16.msra.mxu0 %v658
      %737 = vmatpush.bf16.msra.mxu0 %v657
      %738 = vmatmul.bf16.gmra.mxu0 %v561
      %v739 = vpop.f32.mrf.mxu0
      %v740 = vadd.f32 %v463, %v739
      %v741 = vpop.f32.mrf.mxu0
      %v742 = vadd.f32 %v463, %v741
      %743 = vmatmul.bf16.gmra.mxu0 %v563
      %v744 = vpop.f32.mrf.mxu0
      %v745 = vadd.f32 %v463, %v744
      %v746 = vpop.f32.mrf.mxu0
      %v747 = vadd.f32 %v463, %v746
      %748 = vmatmul.bf16.gmra.mxu0 %v565
      %v749 = vpop.f32.mrf.mxu0
      %v750 = vadd.f32 %v463, %v749
      %v751 = vpop.f32.mrf.mxu0
      %v752 = vadd.f32 %v463, %v751
      %753 = vmatmul.bf16.gmra.mxu0 %v567
      %v754 = vpop.f32.mrf.mxu0
      %v755 = vadd.f32 %v463, %v754
      %v756 = vpop.f32.mrf.mxu0
      %v757 = vadd.f32 %v463, %v756
      %758 = vmatmul.bf16.gmra.mxu0 %v569
      %v759 = vpop.f32.mrf.mxu0
      %v760 = vadd.f32 %v463, %v759
      %v761 = vpop.f32.mrf.mxu0
      %v762 = vadd.f32 %v463, %v761
      %763 = vmatmul.bf16.gmra.mxu0 %v571
      %v764 = vpop.f32.mrf.mxu0
      %v765 = vadd.f32 %v463, %v764
      %v766 = vpop.f32.mrf.mxu0
      %v767 = vadd.f32 %v463, %v766
      %768 = vmatmul.bf16.gmra.mxu0 %v573
      %v769 = vpop.f32.mrf.mxu0
      %v770 = vadd.f32 %v463, %v769
      %v771 = vpop.f32.mrf.mxu0
      %v772 = vadd.f32 %v463, %v771
      %773 = vmatmul.bf16.gmra.mxu0 %v575
      %v774 = vpop.f32.mrf.mxu0
      %v775 = vadd.f32 %v463, %v774
      %v776 = vpop.f32.mrf.mxu0
      %v777 = vadd.f32 %v463, %v776
      %778 = vmatmul.bf16.gmra.mxu0 %v577
      %v779 = vpop.f32.mrf.mxu0
      %v780 = vadd.f32 %v463, %v779
      %v781 = vpop.f32.mrf.mxu0
      %v782 = vadd.f32 %v463, %v781
      %783 = vmatmul.bf16.gmra.mxu0 %v579
      %v784 = vpop.f32.mrf.mxu0
      %v785 = vadd.f32 %v463, %v784
      %v786 = vpop.f32.mrf.mxu0
      %v787 = vadd.f32 %v463, %v786
      %788 = vmatmul.bf16.gmra.mxu0 %v581
      %v789 = vpop.f32.mrf.mxu0
      %v790 = vadd.f32 %v463, %v789
      %v791 = vpop.f32.mrf.mxu0
      %v792 = vadd.f32 %v463, %v791
      %793 = vmatmul.bf16.gmra.mxu0 %v583
      %v794 = vpop.f32.mrf.mxu0
      %v795 = vadd.f32 %v463, %v794
      %v796 = vpop.f32.mrf.mxu0
      %v797 = vadd.f32 %v463, %v796
      %798 = vmatmul.bf16.gmra.mxu0 %v585
      %v799 = vpop.f32.mrf.mxu0
      %v800 = vadd.f32 %v463, %v799
      %v801 = vpop.f32.mrf.mxu0
      %v802 = vadd.f32 %v463, %v801
      %803 = vmatmul.bf16.gmra.mxu0 %v587
      %v804 = vpop.f32.mrf.mxu0
      %v805 = vadd.f32 %v463, %v804
      %v806 = vpop.f32.mrf.mxu0
      %v807 = vadd.f32 %v463, %v806
      %808 = vmatmul.bf16.gmra.mxu0 %v589
      %v809 = vpop.f32.mrf.mxu0
      %v810 = vadd.f32 %v463, %v809
      %v811 = vpop.f32.mrf.mxu0
      %v812 = vadd.f32 %v463, %v811
      %813 = vmatmul.bf16.gmra.mxu0 %v591
      %v814 = vpop.f32.mrf.mxu0
      %v815 = vadd.f32 %v463, %v814
      %v816 = vpop.f32.mrf.mxu0
      %v817 = vadd.f32 %v463, %v816
      %818 = vdwg.mxu0
      %819 = vmatpush.bf16.msra.mxu0 0
      %820 = vmatpush.bf16.msra.mxu0 0
      %821 = vmatpush.bf16.msra.mxu0 0
      %822 = vmatpush.bf16.msra.mxu0 0
      %823 = vmatpush.bf16.msra.mxu0 %v668
      %824 = vmatpush.bf16.msra.mxu0 %v667
      %825 = vmatpush.bf16.msra.mxu0 %v666
      %826 = vmatpush.bf16.msra.mxu0 %v665
      %827 = vmatmul.bf16.gmra.mxu0 %v683
      %v828 = vpop.f32.mrf.mxu0
      %v829 = vadd.f32 %v740, %v828
      %v830 = vpop.f32.mrf.mxu0
      %v831 = vadd.f32 %v742, %v830
      %832 = vmatmul.bf16.gmra.mxu0 %v686
      %v833 = vpop.f32.mrf.mxu0
      %v834 = vadd.f32 %v745, %v833
      %v835 = vpop.f32.mrf.mxu0
      %v836 = vadd.f32 %v747, %v835
      %837 = vmatmul.bf16.gmra.mxu0 %v689
      %v838 = vpop.f32.mrf.mxu0
      %v839 = vadd.f32 %v750, %v838
      %v840 = vpop.f32.mrf.mxu0
      %v841 = vadd.f32 %v752, %v840
      %842 = vmatmul.bf16.gmra.mxu0 %v692
      %v843 = vpop.f32.mrf.mxu0
      %v844 = vadd.f32 %v755, %v843
      %v845 = vpop.f32.mrf.mxu0
      %v846 = vadd.f32 %v757, %v845
      %847 = vmatmul.bf16.gmra.mxu0 %v695
      %v848 = vpop.f32.mrf.mxu0
      %v849 = vadd.f32 %v760, %v848
      %v850 = vpop.f32.mrf.mxu0
      %v851 = vadd.f32 %v762, %v850
      %852 = vmatmul.bf16.gmra.mxu0 %v698
      %v853 = vpop.f32.mrf.mxu0
      %v854 = vadd.f32 %v765, %v853
      %v855 = vpop.f32.mrf.mxu0
      %v856 = vadd.f32 %v767, %v855
      %857 = vmatmul.bf16.gmra.mxu0 %v701
      %v858 = vpop.f32.mrf.mxu0
      %v859 = vadd.f32 %v770, %v858
      %v860 = vpop.f32.mrf.mxu0
      %v861 = vadd.f32 %v772, %v860
      %862 = vmatmul.bf16.gmra.mxu0 %v704
      %v863 = vpop.f32.mrf.mxu0
      %v864 = vadd.f32 %v775, %v863
      %v865 = vpop.f32.mrf.mxu0
      %v866 = vadd.f32 %v777, %v865
      %867 = vmatmul.bf16.gmra.mxu0 %v707
      %v868 = vpop.f32.mrf.mxu0
      %v869 = vadd.f32 %v780, %v868
      %v870 = vpop.f32.mrf.mxu0
      %v871 = vadd.f32 %v782, %v870
      %872 = vmatmul.bf16.gmra.mxu0 %v710
      %v873 = vpop.f32.mrf.mxu0
      %v874 = vadd.f32 %v785, %v873
      %v875 = vpop.f32.mrf.mxu0
      %v876 = vadd.f32 %v787, %v875
      %877 = vmatmul.bf16.gmra.mxu0 %v713
      %v878 = vpop.f32.mrf.mxu0
      %v879 = vadd.f32 %v790, %v878
      %v880 = vpop.f32.mrf.mxu0
      %v881 = vadd.f32 %v792, %v880
      %882 = vmatmul.bf16.gmra.mxu0 %v716
      %v883 = vpop.f32.mrf.mxu0
      %v884 = vadd.f32 %v795, %v883
      %v885 = vpop.f32.mrf.mxu0
      %v886 = vadd.f32 %v797, %v885
      %887 = vmatmul.bf16.gmra.mxu0 %v719
      %v888 = vpop.f32.mrf.mxu0
      %v889 = vadd.f32 %v800, %v888
      %v890 = vpop.f32.mrf.mxu0
      %v891 = vadd.f32 %v802, %v890
      %892 = vmatmul.bf16.gmra.mxu0 %v722
      %v893 = vpop.f32.mrf.mxu0
      %v894 = vadd.f32 %v805, %v893
      %v895 = vpop.f32.mrf.mxu0
      %v896 = vadd.f32 %v807, %v895
      %897 = vmatmul.bf16.gmra.mxu0 %v725
      %v898 = vpop.f32.mrf.mxu0
      %v899 = vadd.f32 %v810, %v898
      %v900 = vpop.f32.mrf.mxu0
      %v901 = vadd.f32 %v812, %v900
      %902 = vmatmul.bf16.gmra.mxu0 %v728
      %v903 = vpop.f32.mrf.mxu0
      %v904 = vadd.f32 %v815, %v903
      %v905 = vpop.f32.mrf.mxu0
      %v906 = vadd.f32 %v817, %v905
      %907 = vdwg.mxu0
      %v908 = vmax.f32 %v829, 0.0
      %v909 = vmax.f32 %v831, 0.0
      %v910 = vmax.f32 %v834, 0.0
      %v911 = vmax.f32 %v836, 0.0
      %v912 = vmax.f32 %v839, 0.0
      %v913 = vmax.f32 %v841, 0.0
      %v914 = vmax.f32 %v844, 0.0
      %v915 = vmax.f32 %v846, 0.0
      %v916 = vmax.f32 %v849, 0.0
      %v917 = vmax.f32 %v851, 0.0
      %v918 = vmax.f32 %v854, 0.0
      %v919 = vmax.f32 %v856, 0.0
      %v920 = vmax.f32 %v859, 0.0
      %v921 = vmax.f32 %v861, 0.0
      %v922 = vmax.f32 %v864, 0.0
      %v923 = vmax.f32 %v866, 0.0
      %v924 = vmax.f32 %v869, 0.0
      %v925 = vmax.f32 %v871, 0.0
      %v926 = vmax.f32 %v874, 0.0
      %v927 = vmax.f32 %v876, 0.0
      %v928 = vmax.f32 %v879, 0.0
      %v929 = vmax.f32 %v881, 0.0
      %v930 = vmax.f32 %v884, 0.0
      %v931 = vmax.f32 %v886, 0.0
      %v932 = vmax.f32 %v889, 0.0
      %v933 = vmax.f32 %v891, 0.0
      %v934 = vmax.f32 %v894, 0.0
      %v935 = vmax.f32 %v896, 0.0
      %v936 = vmax.f32 %v899, 0.0
      %v937 = vmax.f32 %v901, 0.0
      %v938 = vmax.f32 %v904, 0.0
      %v939 = vmax.f32 %v906, 0.0
      %v940 = vpack.c.bf16 %v909, %v908
      %v941 = vpack.c.bf16 %v911, %v910
      %v942 = vpack.c.bf16 %v913, %v912
      %v943 = vpack.c.bf16 %v915, %v914
      %v944 = vpack.c.bf16 %v917, %v916
      %v945 = vpack.c.bf16 %v919, %v918
      %v946 = vpack.c.bf16 %v921, %v920
      %v947 = vpack.c.bf16 %v923, %v922
      %v948 = vpack.c.bf16 %v925, %v924
      %v949 = vpack.c.bf16 %v927, %v926
      %v950 = vpack.c.bf16 %v929, %v928
      %v951 = vpack.c.bf16 %v931, %v930
      %v952 = vpack.c.bf16 %v933, %v932
      %v953 = vpack.c.bf16 %v935, %v934
      %v954 = vpack.c.bf16 %v937, %v936
      %v955 = vpack.c.bf16 %v939, %v938
      %v956 = vld [vmem:[%s3] sm:$0xf]
      %v957 = vld [vmem:[%s3 + $0x4] sm:$0xf]
      %v958 = vld [vmem:[%s3 + $0x8] sm:$0xf]
      %v959 = vld [vmem:[%s3 + $0xc] sm:$0xf]
      %v960 = vld [vmem:[%s3 + $0x10] sm:$0xf]
      %v961 = vld [vmem:[%s3 + $0x14] sm:$0xf]
      %v962 = vld [vmem:[%s3 + $0x18] sm:$0xf]
      %v963 = vld [vmem:[%s3 + $0x1c] sm:$0xf]
      %v964 = vld [vmem:[%s3 + $0x20] sm:$0xf]
      %v965 = vld [vmem:[%s3 + $0x24] sm:$0xf]
      %v966 = vld [vmem:[%s3 + $0x28] sm:$0xf]
      %v967 = vld [vmem:[%s3 + $0x2c] sm:$0xf]
      %v968 = vld [vmem:[%s3 + $0x30] sm:$0xf]
      %v969 = vld [vmem:[%s3 + $0x34] sm:$0xf]
      %v970 = vld [vmem:[%s3 + $0x38] sm:$0xf]
      %v971 = vld [vmem:[%s3 + $0x3c] sm:$0xf]
      %v972 = vld [vmem:[%s4] sm:$0x1]
      %v974 = vperm.slane %v972, 0
      %v992 = vunpack.c.l.b16 %v956
      %v993 = vunpack.c.l.b16 %v957
      %v994 = vunpack.c.l.b16 %v958
      %v995 = vunpack.c.l.b16 %v959
      %v996 = vunpack.c.l.b16 %v960
      %v997 = vunpack.c.l.b16 %v961
      %v998 = vunpack.c.l.b16 %v962
      %v999 = vunpack.c.l.b16 %v963
      %v1000 = vunpack.c.l.b16 %v964
      %v1001 = vunpack.c.l.b16 %v965
      %v1002 = vunpack.c.l.b16 %v966
      %v1003 = vunpack.c.l.b16 %v967
      %v1004 = vunpack.c.l.b16 %v968
      %v1005 = vunpack.c.l.b16 %v969
      %v1006 = vunpack.c.l.b16 %v970
      %v1007 = vunpack.c.l.b16 %v971
      %v1008 = vpack.c.b16 %v993, %v992
      %v1009 = vpack.c.b16 %v995, %v994
      %v1010 = vpack.c.b16 %v997, %v996
      %v1011 = vpack.c.b16 %v999, %v998
      %v1012 = vpack.c.b16 %v1001, %v1000
      %v1013 = vpack.c.b16 %v1003, %v1002
      %v1014 = vpack.c.b16 %v1005, %v1004
      %v1015 = vpack.c.b16 %v1007, %v1006
      %1024 = vmatpush.bf16.msra.mxu0 %v1015
      %1025 = vmatpush.bf16.msra.mxu0 %v1014
      %1026 = vmatpush.bf16.msra.mxu0 %v1013
      %1027 = vmatpush.bf16.msra.mxu0 %v1012
      %1028 = vmatpush.bf16.msra.mxu0 %v1011
      %1029 = vmatpush.bf16.msra.mxu0 %v1010
      %1030 = vmatpush.bf16.msra.mxu0 %v1009
      %1031 = vmatpush.bf16.msra.mxu0 %v1008
      %1032 = vmatmul.bf16.gmra.mxu0 %v940
      %v1033 = vpop.f32.mrf.mxu0
      %v1034 = vadd.f32 %v974, %v1033
      %v1035 = vpop.f32.mrf.mxu0
      %v1036 = vadd.f32 %v974, %v1035
      %1037 = vmatmul.bf16.gmra.mxu0 %v941
      %v1038 = vpop.f32.mrf.mxu0
      %v1039 = vadd.f32 %v974, %v1038
      %v1040 = vpop.f32.mrf.mxu0
      %v1041 = vadd.f32 %v974, %v1040
      %1042 = vmatmul.bf16.gmra.mxu0 %v942
      %v1043 = vpop.f32.mrf.mxu0
      %v1044 = vadd.f32 %v974, %v1043
      %v1045 = vpop.f32.mrf.mxu0
      %v1046 = vadd.f32 %v974, %v1045
      %1047 = vmatmul.bf16.gmra.mxu0 %v943
      %v1048 = vpop.f32.mrf.mxu0
      %v1049 = vadd.f32 %v974, %v1048
      %v1050 = vpop.f32.mrf.mxu0
      %v1051 = vadd.f32 %v974, %v1050
      %1052 = vmatmul.bf16.gmra.mxu0 %v944
      %v1053 = vpop.f32.mrf.mxu0
      %v1054 = vadd.f32 %v974, %v1053
      %v1055 = vpop.f32.mrf.mxu0
      %v1056 = vadd.f32 %v974, %v1055
      %1057 = vmatmul.bf16.gmra.mxu0 %v945
      %v1058 = vpop.f32.mrf.mxu0
      %v1059 = vadd.f32 %v974, %v1058
      %v1060 = vpop.f32.mrf.mxu0
      %v1061 = vadd.f32 %v974, %v1060
      %1062 = vmatmul.bf16.gmra.mxu0 %v946
      %v1063 = vpop.f32.mrf.mxu0
      %v1064 = vadd.f32 %v974, %v1063
      %v1065 = vpop.f32.mrf.mxu0
      %v1066 = vadd.f32 %v974, %v1065
      %1067 = vmatmul.bf16.gmra.mxu0 %v947
      %v1068 = vpop.f32.mrf.mxu0
      %v1069 = vadd.f32 %v974, %v1068
      %v1070 = vpop.f32.mrf.mxu0
      %v1071 = vadd.f32 %v974, %v1070
      %1072 = vmatmul.bf16.gmra.mxu0 %v948
      %v1073 = vpop.f32.mrf.mxu0
      %v1074 = vadd.f32 %v974, %v1073
      %v1075 = vpop.f32.mrf.mxu0
      %v1076 = vadd.f32 %v974, %v1075
      %1077 = vmatmul.bf16.gmra.mxu0 %v949
      %v1078 = vpop.f32.mrf.mxu0
      %v1079 = vadd.f32 %v974, %v1078
      %v1080 = vpop.f32.mrf.mxu0
      %v1081 = vadd.f32 %v974, %v1080
      %1082 = vmatmul.bf16.gmra.mxu0 %v950
      %v1083 = vpop.f32.mrf.mxu0
      %v1084 = vadd.f32 %v974, %v1083
      %v1085 = vpop.f32.mrf.mxu0
      %v1086 = vadd.f32 %v974, %v1085
      %1087 = vmatmul.bf16.gmra.mxu0 %v951
      %v1088 = vpop.f32.mrf.mxu0
      %v1089 = vadd.f32 %v974, %v1088
      %v1090 = vpop.f32.mrf.mxu0
      %v1091 = vadd.f32 %v974, %v1090
      %1092 = vmatmul.bf16.gmra.mxu0 %v952
      %v1093 = vpop.f32.mrf.mxu0
      %v1094 = vadd.f32 %v974, %v1093
      %v1095 = vpop.f32.mrf.mxu0
      %v1096 = vadd.f32 %v974, %v1095
      %1097 = vmatmul.bf16.gmra.mxu0 %v953
      %v1098 = vpop.f32.mrf.mxu0
      %v1099 = vadd.f32 %v974, %v1098
      %v1100 = vpop.f32.mrf.mxu0
      %v1101 = vadd.f32 %v974, %v1100
      %1102 = vmatmul.bf16.gmra.mxu0 %v954
      %v1103 = vpop.f32.mrf.mxu0
      %v1104 = vadd.f32 %v974, %v1103
      %v1105 = vpop.f32.mrf.mxu0
      %v1106 = vadd.f32 %v974, %v1105
      %1107 = vmatmul.bf16.gmra.mxu0 %v955
      %v1108 = vpop.f32.mrf.mxu0
      %v1109 = vadd.f32 %v974, %v1108
      %v1110 = vpop.f32.mrf.mxu0
      %v1111 = vadd.f32 %v974, %v1110
      %1112 = vdwg.mxu0
      %v1113 = vmax.f32 %v1034, 0.0
      %v1114 = vmax.f32 %v1036, 0.0
      %v1115 = vmax.f32 %v1039, 0.0
      %v1116 = vmax.f32 %v1041, 0.0
      %v1117 = vmax.f32 %v1044, 0.0
      %v1118 = vmax.f32 %v1046, 0.0
      %v1119 = vmax.f32 %v1049, 0.0
      %v1120 = vmax.f32 %v1051, 0.0
      %v1121 = vmax.f32 %v1054, 0.0
      %v1122 = vmax.f32 %v1056, 0.0
      %v1123 = vmax.f32 %v1059, 0.0
      %v1124 = vmax.f32 %v1061, 0.0
      %v1125 = vmax.f32 %v1064, 0.0
      %v1126 = vmax.f32 %v1066, 0.0
      %v1127 = vmax.f32 %v1069, 0.0
      %v1128 = vmax.f32 %v1071, 0.0
      %v1129 = vmax.f32 %v1074, 0.0
      %v1130 = vmax.f32 %v1076, 0.0
      %v1131 = vmax.f32 %v1079, 0.0
      %v1132 = vmax.f32 %v1081, 0.0
      %v1133 = vmax.f32 %v1084, 0.0
      %v1134 = vmax.f32 %v1086, 0.0
      %v1135 = vmax.f32 %v1089, 0.0
      %v1136 = vmax.f32 %v1091, 0.0
      %v1137 = vmax.f32 %v1094, 0.0
      %v1138 = vmax.f32 %v1096, 0.0
      %v1139 = vmax.f32 %v1099, 0.0
      %v1140 = vmax.f32 %v1101, 0.0
      %v1141 = vmax.f32 %v1104, 0.0
      %v1142 = vmax.f32 %v1106, 0.0
      %v1143 = vmax.f32 %v1109, 0.0
      %v1144 = vmax.f32 %v1111, 0.0
      %v1145 = vpack.c.bf16 %v1114, %v1113
      %v1146 = vpack.c.bf16 %v1116, %v1115
      %v1147 = vpack.c.bf16 %v1118, %v1117
      %v1148 = vpack.c.bf16 %v1120, %v1119
      %v1149 = vpack.c.bf16 %v1122, %v1121
      %v1150 = vpack.c.bf16 %v1124, %v1123
      %v1151 = vpack.c.bf16 %v1126, %v1125
      %v1152 = vpack.c.bf16 %v1128, %v1127
      %v1153 = vpack.c.bf16 %v1130, %v1129
      %v1154 = vpack.c.bf16 %v1132, %v1131
      %v1155 = vpack.c.bf16 %v1134, %v1133
      %v1156 = vpack.c.bf16 %v1136, %v1135
      %v1157 = vpack.c.bf16 %v1138, %v1137
      %v1158 = vpack.c.bf16 %v1140, %v1139
      %v1159 = vpack.c.bf16 %v1142, %v1141
      %v1160 = vpack.c.bf16 %v1144, %v1143
      %v1161 = vld [vmem:[%s5] sm:$0xf]
      %v1162 = vld [vmem:[%s5 + $0x4] sm:$0xf]
      %v1163 = vld [vmem:[%s5 + $0x8] sm:$0xf]
      %v1164 = vld [vmem:[%s5 + $0xc] sm:$0xf]
      %v1165 = vld [vmem:[%s5 + $0x10] sm:$0xf]
      %v1166 = vld [vmem:[%s5 + $0x14] sm:$0xf]
      %v1167 = vld [vmem:[%s5 + $0x18] sm:$0xf]
      %v1168 = vld [vmem:[%s5 + $0x1c] sm:$0xf]
      %v1169 = vld [vmem:[%s5 + $0x20] sm:$0xf]
      %v1170 = vld [vmem:[%s5 + $0x24] sm:$0xf]
      %v1171 = vld [vmem:[%s5 + $0x28] sm:$0xf]
      %v1172 = vld [vmem:[%s5 + $0x2c] sm:$0xf]
      %v1173 = vld [vmem:[%s5 + $0x30] sm:$0xf]
      %v1174 = vld [vmem:[%s5 + $0x34] sm:$0xf]
      %v1175 = vld [vmem:[%s5 + $0x38] sm:$0xf]
      %v1176 = vld [vmem:[%s5 + $0x3c] sm:$0xf]
      %v1177 = vld [vmem:[%s6] sm:$0x1]
      %v1179 = vperm.slane %v1177, 0
      %v1197 = vunpack.c.l.b16 %v1161
      %v1198 = vunpack.c.l.b16 %v1162
      %v1199 = vunpack.c.l.b16 %v1163
      %v1200 = vunpack.c.l.b16 %v1164
      %v1201 = vunpack.c.l.b16 %v1165
      %v1202 = vunpack.c.l.b16 %v1166
      %v1203 = vunpack.c.l.b16 %v1167
      %v1204 = vunpack.c.l.b16 %v1168
      %v1205 = vunpack.c.l.b16 %v1169
      %v1206 = vunpack.c.l.b16 %v1170
      %v1207 = vunpack.c.l.b16 %v1171
      %v1208 = vunpack.c.l.b16 %v1172
      %v1209 = vunpack.c.l.b16 %v1173
      %v1210 = vunpack.c.l.b16 %v1174
      %v1211 = vunpack.c.l.b16 %v1175
      %v1212 = vunpack.c.l.b16 %v1176
      %v1213 = vpack.c.b16 %v1198, %v1197
      %v1214 = vpack.c.b16 %v1200, %v1199
      %v1215 = vpack.c.b16 %v1202, %v1201
      %v1216 = vpack.c.b16 %v1204, %v1203
      %v1217 = vpack.c.b16 %v1206, %v1205
      %v1218 = vpack.c.b16 %v1208, %v1207
      %v1219 = vpack.c.b16 %v1210, %v1209
      %v1220 = vpack.c.b16 %v1212, %v1211
      %1229 = vmatpush.bf16.msra.mxu0 %v1220
      %1230 = vmatpush.bf16.msra.mxu0 %v1219
      %1231 = vmatpush.bf16.msra.mxu0 %v1218
      %1232 = vmatpush.bf16.msra.mxu0 %v1217
      %1233 = vmatpush.bf16.msra.mxu0 %v1216
      %1234 = vmatpush.bf16.msra.mxu0 %v1215
      %1235 = vmatpush.bf16.msra.mxu0 %v1214
      %1236 = vmatpush.bf16.msra.mxu0 %v1213
      %1237 = vmatmul.bf16.gmra.mxu0 %v1145
      %v1238 = vpop.f32.mrf.mxu0
      %v1239 = vadd.f32 %v1179, %v1238
      %v1240 = vpop.f32.mrf.mxu0
      %v1241 = vadd.f32 %v1179, %v1240
      %1242 = vmatmul.bf16.gmra.mxu0 %v1146
      %v1243 = vpop.f32.mrf.mxu0
      %v1244 = vadd.f32 %v1179, %v1243
      %v1245 = vpop.f32.mrf.mxu0
      %v1246 = vadd.f32 %v1179, %v1245
      %1247 = vmatmul.bf16.gmra.mxu0 %v1147
      %v1248 = vpop.f32.mrf.mxu0
      %v1249 = vadd.f32 %v1179, %v1248
      %v1250 = vpop.f32.mrf.mxu0
      %v1251 = vadd.f32 %v1179, %v1250
      %1252 = vmatmul.bf16.gmra.mxu0 %v1148
      %v1253 = vpop.f32.mrf.mxu0
      %v1254 = vadd.f32 %v1179, %v1253
      %v1255 = vpop.f32.mrf.mxu0
      %v1256 = vadd.f32 %v1179, %v1255
      %1257 = vmatmul.bf16.gmra.mxu0 %v1149
      %v1258 = vpop.f32.mrf.mxu0
      %v1259 = vadd.f32 %v1179, %v1258
      %v1260 = vpop.f32.mrf.mxu0
      %v1261 = vadd.f32 %v1179, %v1260
      %1262 = vmatmul.bf16.gmra.mxu0 %v1150
      %v1263 = vpop.f32.mrf.mxu0
      %v1264 = vadd.f32 %v1179, %v1263
      %v1265 = vpop.f32.mrf.mxu0
      %v1266 = vadd.f32 %v1179, %v1265
      %1267 = vmatmul.bf16.gmra.mxu0 %v1151
      %v1268 = vpop.f32.mrf.mxu0
      %v1269 = vadd.f32 %v1179, %v1268
      %v1270 = vpop.f32.mrf.mxu0
      %v1271 = vadd.f32 %v1179, %v1270
      %1272 = vmatmul.bf16.gmra.mxu0 %v1152
      %v1273 = vpop.f32.mrf.mxu0
      %v1274 = vadd.f32 %v1179, %v1273
      %v1275 = vpop.f32.mrf.mxu0
      %v1276 = vadd.f32 %v1179, %v1275
      %1277 = vmatmul.bf16.gmra.mxu0 %v1153
      %v1278 = vpop.f32.mrf.mxu0
      %v1279 = vadd.f32 %v1179, %v1278
      %v1280 = vpop.f32.mrf.mxu0
      %v1281 = vadd.f32 %v1179, %v1280
      %1282 = vmatmul.bf16.gmra.mxu0 %v1154
      %v1283 = vpop.f32.mrf.mxu0
      %v1284 = vadd.f32 %v1179, %v1283
      %v1285 = vpop.f32.mrf.mxu0
      %v1286 = vadd.f32 %v1179, %v1285
      %1287 = vmatmul.bf16.gmra.mxu0 %v1155
      %v1288 = vpop.f32.mrf.mxu0
      %v1289 = vadd.f32 %v1179, %v1288
      %v1290 = vpop.f32.mrf.mxu0
      %v1291 = vadd.f32 %v1179, %v1290
      %1292 = vmatmul.bf16.gmra.mxu0 %v1156
      %v1293 = vpop.f32.mrf.mxu0
      %v1294 = vadd.f32 %v1179, %v1293
      %v1295 = vpop.f32.mrf.mxu0
      %v1296 = vadd.f32 %v1179, %v1295
      %1297 = vmatmul.bf16.gmra.mxu0 %v1157
      %v1298 = vpop.f32.mrf.mxu0
      %v1299 = vadd.f32 %v1179, %v1298
      %v1300 = vpop.f32.mrf.mxu0
      %v1301 = vadd.f32 %v1179, %v1300
      %1302 = vmatmul.bf16.gmra.mxu0 %v1158
      %v1303 = vpop.f32.mrf.mxu0
      %v1304 = vadd.f32 %v1179, %v1303
      %v1305 = vpop.f32.mrf.mxu0
      %v1306 = vadd.f32 %v1179, %v1305
      %1307 = vmatmul.bf16.gmra.mxu0 %v1159
      %v1308 = vpop.f32.mrf.mxu0
      %v1309 = vadd.f32 %v1179, %v1308
      %v1310 = vpop.f32.mrf.mxu0
      %v1311 = vadd.f32 %v1179, %v1310
      %1312 = vmatmul.bf16.gmra.mxu0 %v1160
      %v1313 = vpop.f32.mrf.mxu0
      %v1314 = vadd.f32 %v1179, %v1313
      %v1315 = vpop.f32.mrf.mxu0
      %v1316 = vadd.f32 %v1179, %v1315
      %1317 = vdwg.mxu0
      %v1318 = vmax.f32 %v1239, 0.0
      %v1319 = vmax.f32 %v1241, 0.0
      %v1320 = vmax.f32 %v1244, 0.0
      %v1321 = vmax.f32 %v1246, 0.0
      %v1322 = vmax.f32 %v1249, 0.0
      %v1323 = vmax.f32 %v1251, 0.0
      %v1324 = vmax.f32 %v1254, 0.0
      %v1325 = vmax.f32 %v1256, 0.0
      %v1326 = vmax.f32 %v1259, 0.0
      %v1327 = vmax.f32 %v1261, 0.0
      %v1328 = vmax.f32 %v1264, 0.0
      %v1329 = vmax.f32 %v1266, 0.0
      %v1330 = vmax.f32 %v1269, 0.0
      %v1331 = vmax.f32 %v1271, 0.0
      %v1332 = vmax.f32 %v1274, 0.0
      %v1333 = vmax.f32 %v1276, 0.0
      %v1334 = vmax.f32 %v1279, 0.0
      %v1335 = vmax.f32 %v1281, 0.0
      %v1336 = vmax.f32 %v1284, 0.0
      %v1337 = vmax.f32 %v1286, 0.0
      %v1338 = vmax.f32 %v1289, 0.0
      %v1339 = vmax.f32 %v1291, 0.0
      %v1340 = vmax.f32 %v1294, 0.0
      %v1341 = vmax.f32 %v1296, 0.0
      %v1342 = vmax.f32 %v1299, 0.0
      %v1343 = vmax.f32 %v1301, 0.0
      %v1344 = vmax.f32 %v1304, 0.0
      %v1345 = vmax.f32 %v1306, 0.0
      %v1346 = vmax.f32 %v1309, 0.0
      %v1347 = vmax.f32 %v1311, 0.0
      %v1348 = vmax.f32 %v1314, 0.0
      %v1349 = vmax.f32 %v1316, 0.0
      %v1350 = vld [vmem:[%s7] sm:$0x1]
      %v1352 = vperm.slane %v1350, 0
      %v1354 = vmul.f32 %v1318, %v1352
      %v1355 = vmul.f32 %v1319, %v1352
      %v1356 = vmul.f32 %v1320, %v1352
      %v1357 = vmul.f32 %v1321, %v1352
      %v1358 = vmul.f32 %v1322, %v1352
      %v1359 = vmul.f32 %v1323, %v1352
      %v1360 = vmul.f32 %v1324, %v1352
      %v1361 = vmul.f32 %v1325, %v1352
      %v1362 = vmul.f32 %v1326, %v1352
      %v1363 = vmul.f32 %v1327, %v1352
      %v1364 = vmul.f32 %v1328, %v1352
      %v1365 = vmul.f32 %v1329, %v1352
      %v1366 = vmul.f32 %v1330, %v1352
      %v1367 = vmul.f32 %v1331, %v1352
      %v1368 = vmul.f32 %v1332, %v1352
      %v1369 = vmul.f32 %v1333, %v1352
      %v1370 = vmul.f32 %v1334, %v1352
      %v1371 = vmul.f32 %v1335, %v1352
      %v1372 = vmul.f32 %v1336, %v1352
      %v1373 = vmul.f32 %v1337, %v1352
      %v1374 = vmul.f32 %v1338, %v1352
      %v1375 = vmul.f32 %v1339, %v1352
      %v1376 = vmul.f32 %v1340, %v1352
      %v1377 = vmul.f32 %v1341, %v1352
      %v1378 = vmul.f32 %v1342, %v1352
      %v1379 = vmul.f32 %v1343, %v1352
      %v1380 = vmul.f32 %v1344, %v1352
      %v1381 = vmul.f32 %v1345, %v1352
      %v1382 = vmul.f32 %v1346, %v1352
      %v1383 = vmul.f32 %v1347, %v1352
      %v1384 = vmul.f32 %v1348, %v1352
      %v1385 = vmul.f32 %v1349, %v1352
      %1386 = vadd.xlane.f32.xlu0 %v1354
      %v1387 = vpop.xlane.xlu0 %1386
      %1388 = vadd.xlane.f32.xlu0 %v1355
      %v1389 = vpop.xlane.xlu0 %1388
      %1390 = vadd.xlane.f32.xlu0 %v1356
      %v1391 = vpop.xlane.xlu0 %1390
      %1392 = vadd.xlane.f32.xlu0 %v1357
      %v1393 = vpop.xlane.xlu0 %1392
      %1394 = vadd.xlane.f32.xlu0 %v1358
      %v1395 = vpop.xlane.xlu0 %1394
      %1396 = vadd.xlane.f32.xlu0 %v1359
      %v1397 = vpop.xlane.xlu0 %1396
      %1398 = vadd.xlane.f32.xlu0 %v1360
      %v1399 = vpop.xlane.xlu0 %1398
      %1400 = vadd.xlane.f32.xlu0 %v1361
      %v1401 = vpop.xlane.xlu0 %1400
      %1402 = vadd.xlane.f32.xlu0 %v1362
      %v1403 = vpop.xlane.xlu0 %1402
      %1404 = vadd.xlane.f32.xlu0 %v1363
      %v1405 = vpop.xlane.xlu0 %1404
      %1406 = vadd.xlane.f32.xlu0 %v1364
      %v1407 = vpop.xlane.xlu0 %1406
      %1408 = vadd.xlane.f32.xlu0 %v1365
      %v1409 = vpop.xlane.xlu0 %1408
      %1410 = vadd.xlane.f32.xlu0 %v1366
      %v1411 = vpop.xlane.xlu0 %1410
      %1412 = vadd.xlane.f32.xlu0 %v1367
      %v1413 = vpop.xlane.xlu0 %1412
      %1414 = vadd.xlane.f32.xlu0 %v1368
      %v1415 = vpop.xlane.xlu0 %1414
      %1416 = vadd.xlane.f32.xlu0 %v1369
      %v1417 = vpop.xlane.xlu0 %1416
      %1418 = vadd.xlane.f32.xlu0 %v1370
      %v1419 = vpop.xlane.xlu0 %1418
      %1420 = vadd.xlane.f32.xlu0 %v1371
      %v1421 = vpop.xlane.xlu0 %1420
      %1422 = vadd.xlane.f32.xlu0 %v1372
      %v1423 = vpop.xlane.xlu0 %1422
      %1424 = vadd.xlane.f32.xlu0 %v1373
      %v1425 = vpop.xlane.xlu0 %1424
      %1426 = vadd.xlane.f32.xlu0 %v1374
      %v1427 = vpop.xlane.xlu0 %1426
      %1428 = vadd.xlane.f32.xlu0 %v1375
      %v1429 = vpop.xlane.xlu0 %1428
      %1430 = vadd.xlane.f32.xlu0 %v1376
      %v1431 = vpop.xlane.xlu0 %1430
      %1432 = vadd.xlane.f32.xlu0 %v1377
      %v1433 = vpop.xlane.xlu0 %1432
      %1434 = vadd.xlane.f32.xlu0 %v1378
      %v1435 = vpop.xlane.xlu0 %1434
      %1436 = vadd.xlane.f32.xlu0 %v1379
      %v1437 = vpop.xlane.xlu0 %1436
      %1438 = vadd.xlane.f32.xlu0 %v1380
      %v1439 = vpop.xlane.xlu0 %1438
      %1440 = vadd.xlane.f32.xlu0 %v1381
      %v1441 = vpop.xlane.xlu0 %1440
      %1442 = vadd.xlane.f32.xlu0 %v1382
      %v1443 = vpop.xlane.xlu0 %1442
      %1444 = vadd.xlane.f32.xlu0 %v1383
      %v1445 = vpop.xlane.xlu0 %1444
      %1446 = vadd.xlane.f32.xlu0 %v1384
      %v1447 = vpop.xlane.xlu0 %1446
      %1448 = vadd.xlane.f32.xlu0 %v1385
      %v1449 = vpop.xlane.xlu0 %1448
      %s1450 = sld [smem:[#allocation2]]
      %v1451 = vstv %s1450
      %v1452 = vadd.f32 %v1387, %v1451
      %v1453 = vadd.f32 %v1389, %v1451
      %v1454 = vadd.f32 %v1391, %v1451
      %v1455 = vadd.f32 %v1393, %v1451
      %v1456 = vadd.f32 %v1395, %v1451
      %v1457 = vadd.f32 %v1397, %v1451
      %v1458 = vadd.f32 %v1399, %v1451
      %v1459 = vadd.f32 %v1401, %v1451
      %v1460 = vadd.f32 %v1403, %v1451
      %v1461 = vadd.f32 %v1405, %v1451
      %v1462 = vadd.f32 %v1407, %v1451
      %v1463 = vadd.f32 %v1409, %v1451
      %v1464 = vadd.f32 %v1411, %v1451
      %v1465 = vadd.f32 %v1413, %v1451
      %v1466 = vadd.f32 %v1415, %v1451
      %v1467 = vadd.f32 %v1417, %v1451
      %v1468 = vadd.f32 %v1419, %v1451
      %v1469 = vadd.f32 %v1421, %v1451
      %v1470 = vadd.f32 %v1423, %v1451
      %v1471 = vadd.f32 %v1425, %v1451
      %v1472 = vadd.f32 %v1427, %v1451
      %v1473 = vadd.f32 %v1429, %v1451
      %v1474 = vadd.f32 %v1431, %v1451
      %v1475 = vadd.f32 %v1433, %v1451
      %v1476 = vadd.f32 %v1435, %v1451
      %v1477 = vadd.f32 %v1437, %v1451
      %v1478 = vadd.f32 %v1439, %v1451
      %v1479 = vadd.f32 %v1441, %v1451
      %v1480 = vadd.f32 %v1443, %v1451
      %v1481 = vadd.f32 %v1445, %v1451
      %v1482 = vadd.f32 %v1447, %v1451
      %v1483 = vadd.f32 %v1449, %v1451
      %v1484 = vsel %vm681, %v374, 0.0
      %v1485 = vadd.f32 %v373, %v1484
      %1486 = vadd.xlane.f32.xlu0 %v1485
      %v1487 = vpop.xlane.xlu0 %1486
      %v1488 = vsel %vm681, %v376, 0.0
      %v1489 = vadd.f32 %v375, %v1488
      %1490 = vadd.xlane.f32.xlu0 %v1489
      %v1491 = vpop.xlane.xlu0 %1490
      %v1492 = vsel %vm681, %v378, 0.0
      %v1493 = vadd.f32 %v377, %v1492
      %1494 = vadd.xlane.f32.xlu0 %v1493
      %v1495 = vpop.xlane.xlu0 %1494
      %v1496 = vsel %vm681, %v380, 0.0
      %v1497 = vadd.f32 %v379, %v1496
      %1498 = vadd.xlane.f32.xlu0 %v1497
      %v1499 = vpop.xlane.xlu0 %1498
      %v1500 = vsel %vm681, %v382, 0.0
      %v1501 = vadd.f32 %v381, %v1500
      %1502 = vadd.xlane.f32.xlu0 %v1501
      %v1503 = vpop.xlane.xlu0 %1502
      %v1504 = vsel %vm681, %v384, 0.0
      %v1505 = vadd.f32 %v383, %v1504
      %1506 = vadd.xlane.f32.xlu0 %v1505
      %v1507 = vpop.xlane.xlu0 %1506
      %v1508 = vsel %vm681, %v386, 0.0
      %v1509 = vadd.f32 %v385, %v1508
      %1510 = vadd.xlane.f32.xlu0 %v1509
      %v1511 = vpop.xlane.xlu0 %1510
      %v1512 = vsel %vm681, %v388, 0.0
      %v1513 = vadd.f32 %v387, %v1512
      %1514 = vadd.xlane.f32.xlu0 %v1513
      %v1515 = vpop.xlane.xlu0 %1514
      %v1516 = vsel %vm681, %v390, 0.0
      %v1517 = vadd.f32 %v389, %v1516
      %1518 = vadd.xlane.f32.xlu0 %v1517
      %v1519 = vpop.xlane.xlu0 %1518
      %v1520 = vsel %vm681, %v392, 0.0
      %v1521 = vadd.f32 %v391, %v1520
      %1522 = vadd.xlane.f32.xlu0 %v1521
      %v1523 = vpop.xlane.xlu0 %1522
      %v1524 = vsel %vm681, %v394, 0.0
      %v1525 = vadd.f32 %v393, %v1524
      %1526 = vadd.xlane.f32.xlu0 %v1525
      %v1527 = vpop.xlane.xlu0 %1526
      %v1528 = vsel %vm681, %v396, 0.0
      %v1529 = vadd.f32 %v395, %v1528
      %1530 = vadd.xlane.f32.xlu0 %v1529
      %v1531 = vpop.xlane.xlu0 %1530
      %v1532 = vsel %vm681, %v398, 0.0
      %v1533 = vadd.f32 %v397, %v1532
      %1534 = vadd.xlane.f32.xlu0 %v1533
      %v1535 = vpop.xlane.xlu0 %1534
      %v1536 = vsel %vm681, %v400, 0.0
      %v1537 = vadd.f32 %v399, %v1536
      %1538 = vadd.xlane.f32.xlu0 %v1537
      %v1539 = vpop.xlane.xlu0 %1538
      %v1540 = vsel %vm681, %v402, 0.0
      %v1541 = vadd.f32 %v401, %v1540
      %1542 = vadd.xlane.f32.xlu0 %v1541
      %v1543 = vpop.xlane.xlu0 %1542
      %v1544 = vsel %vm681, %v404, 0.0
      %v1545 = vadd.f32 %v403, %v1544
      %1546 = vadd.xlane.f32.xlu0 %v1545
      %v1547 = vpop.xlane.xlu0 %1546
      %v1548 = vsel %vm681, %v406, 0.0
      %v1549 = vadd.f32 %v405, %v1548
      %1550 = vadd.xlane.f32.xlu0 %v1549
      %v1551 = vpop.xlane.xlu0 %1550
      %v1552 = vsel %vm681, %v408, 0.0
      %v1553 = vadd.f32 %v407, %v1552
      %1554 = vadd.xlane.f32.xlu0 %v1553
      %v1555 = vpop.xlane.xlu0 %1554
      %v1556 = vsel %vm681, %v410, 0.0
      %v1557 = vadd.f32 %v409, %v1556
      %1558 = vadd.xlane.f32.xlu0 %v1557
      %v1559 = vpop.xlane.xlu0 %1558
      %v1560 = vsel %vm681, %v412, 0.0
      %v1561 = vadd.f32 %v411, %v1560
      %1562 = vadd.xlane.f32.xlu0 %v1561
      %v1563 = vpop.xlane.xlu0 %1562
      %v1564 = vsel %vm681, %v414, 0.0
      %v1565 = vadd.f32 %v413, %v1564
      %1566 = vadd.xlane.f32.xlu0 %v1565
      %v1567 = vpop.xlane.xlu0 %1566
      %v1568 = vsel %vm681, %v416, 0.0
      %v1569 = vadd.f32 %v415, %v1568
      %1570 = vadd.xlane.f32.xlu0 %v1569
      %v1571 = vpop.xlane.xlu0 %1570
      %v1572 = vsel %vm681, %v418, 0.0
      %v1573 = vadd.f32 %v417, %v1572
      %1574 = vadd.xlane.f32.xlu0 %v1573
      %v1575 = vpop.xlane.xlu0 %1574
      %v1576 = vsel %vm681, %v420, 0.0
      %v1577 = vadd.f32 %v419, %v1576
      %1578 = vadd.xlane.f32.xlu0 %v1577
      %v1579 = vpop.xlane.xlu0 %1578
      %v1580 = vsel %vm681, %v422, 0.0
      %v1581 = vadd.f32 %v421, %v1580
      %1582 = vadd.xlane.f32.xlu0 %v1581
      %v1583 = vpop.xlane.xlu0 %1582
      %v1584 = vsel %vm681, %v424, 0.0
      %v1585 = vadd.f32 %v423, %v1584
      %1586 = vadd.xlane.f32.xlu0 %v1585
      %v1587 = vpop.xlane.xlu0 %1586
      %v1588 = vsel %vm681, %v426, 0.0
      %v1589 = vadd.f32 %v425, %v1588
      %1590 = vadd.xlane.f32.xlu0 %v1589
      %v1591 = vpop.xlane.xlu0 %1590
      %v1592 = vsel %vm681, %v428, 0.0
      %v1593 = vadd.f32 %v427, %v1592
      %1594 = vadd.xlane.f32.xlu0 %v1593
      %v1595 = vpop.xlane.xlu0 %1594
      %v1596 = vsel %vm681, %v430, 0.0
      %v1597 = vadd.f32 %v429, %v1596
      %1598 = vadd.xlane.f32.xlu0 %v1597
      %v1599 = vpop.xlane.xlu0 %1598
      %v1600 = vsel %vm681, %v432, 0.0
      %v1601 = vadd.f32 %v431, %v1600
      %1602 = vadd.xlane.f32.xlu0 %v1601
      %v1603 = vpop.xlane.xlu0 %1602
      %v1604 = vsel %vm681, %v434, 0.0
      %v1605 = vadd.f32 %v433, %v1604
      %1606 = vadd.xlane.f32.xlu0 %v1605
      %v1607 = vpop.xlane.xlu0 %1606
      %v1608 = vsel %vm681, %v436, 0.0
      %v1609 = vadd.f32 %v435, %v1608
      %1610 = vadd.xlane.f32.xlu0 %v1609
      %v1611 = vpop.xlane.xlu0 %1610
      %v1612 = vmul.f32 %v373, %v373
      %v1613 = vmul.f32 %v374, %v374
      %v1614 = vmul.f32 %v375, %v375
      %v1615 = vmul.f32 %v376, %v376
      %v1616 = vmul.f32 %v377, %v377
      %v1617 = vmul.f32 %v378, %v378
      %v1618 = vmul.f32 %v379, %v379
      %v1619 = vmul.f32 %v380, %v380
      %v1620 = vmul.f32 %v381, %v381
      %v1621 = vmul.f32 %v382, %v382
      %v1622 = vmul.f32 %v383, %v383
      %v1623 = vmul.f32 %v384, %v384
      %v1624 = vmul.f32 %v385, %v385
      %v1625 = vmul.f32 %v386, %v386
      %v1626 = vmul.f32 %v387, %v387
      %v1627 = vmul.f32 %v388, %v388
      %v1628 = vmul.f32 %v389, %v389
      %v1629 = vmul.f32 %v390, %v390
      %v1630 = vmul.f32 %v391, %v391
      %v1631 = vmul.f32 %v392, %v392
      %v1632 = vmul.f32 %v393, %v393
      %v1633 = vmul.f32 %v394, %v394
      %v1634 = vmul.f32 %v395, %v395
      %v1635 = vmul.f32 %v396, %v396
      %v1636 = vmul.f32 %v397, %v397
      %v1637 = vmul.f32 %v398, %v398
      %v1638 = vmul.f32 %v399, %v399
      %v1639 = vmul.f32 %v400, %v400
      %v1640 = vmul.f32 %v401, %v401
      %v1641 = vmul.f32 %v402, %v402
      %v1642 = vmul.f32 %v403, %v403
      %v1643 = vmul.f32 %v404, %v404
      %v1644 = vmul.f32 %v405, %v405
      %v1645 = vmul.f32 %v406, %v406
      %v1646 = vmul.f32 %v407, %v407
      %v1647 = vmul.f32 %v408, %v408
      %v1648 = vmul.f32 %v409, %v409
      %v1649 = vmul.f32 %v410, %v410
      %v1650 = vmul.f32 %v411, %v411
      %v1651 = vmul.f32 %v412, %v412
      %v1652 = vmul.f32 %v413, %v413
      %v1653 = vmul.f32 %v414, %v414
      %v1654 = vmul.f32 %v415, %v415
      %v1655 = vmul.f32 %v416, %v416
      %v1656 = vmul.f32 %v417, %v417
      %v1657 = vmul.f32 %v418, %v418
      %v1658 = vmul.f32 %v419, %v419
      %v1659 = vmul.f32 %v420, %v420
      %v1660 = vmul.f32 %v421, %v421
      %v1661 = vmul.f32 %v422, %v422
      %v1662 = vmul.f32 %v423, %v423
      %v1663 = vmul.f32 %v424, %v424
      %v1664 = vmul.f32 %v425, %v425
      %v1665 = vmul.f32 %v426, %v426
      %v1666 = vmul.f32 %v427, %v427
      %v1667 = vmul.f32 %v428, %v428
      %v1668 = vmul.f32 %v429, %v429
      %v1669 = vmul.f32 %v430, %v430
      %v1670 = vmul.f32 %v431, %v431
      %v1671 = vmul.f32 %v432, %v432
      %v1672 = vmul.f32 %v433, %v433
      %v1673 = vmul.f32 %v434, %v434
      %v1674 = vmul.f32 %v435, %v435
      %v1675 = vmul.f32 %v436, %v436
      %v1676 = vsel %vm681, %v1613, 0.0
      %v1677 = vadd.f32 %v1612, %v1676
      %1678 = vadd.xlane.f32.xlu0 %v1677
      %v1679 = vpop.xlane.xlu0 %1678
      %v1680 = vsel %vm681, %v1615, 0.0
      %v1681 = vadd.f32 %v1614, %v1680
      %1682 = vadd.xlane.f32.xlu0 %v1681
      %v1683 = vpop.xlane.xlu0 %1682
      %v1684 = vsel %vm681, %v1617, 0.0
      %v1685 = vadd.f32 %v1616, %v1684
      %1686 = vadd.xlane.f32.xlu0 %v1685
      %v1687 = vpop.xlane.xlu0 %1686
      %v1688 = vsel %vm681, %v1619, 0.0
      %v1689 = vadd.f32 %v1618, %v1688
      %1690 = vadd.xlane.f32.xlu0 %v1689
      %v1691 = vpop.xlane.xlu0 %1690
      %v1692 = vsel %vm681, %v1621, 0.0
      %v1693 = vadd.f32 %v1620, %v1692
      %1694 = vadd.xlane.f32.xlu0 %v1693
      %v1695 = vpop.xlane.xlu0 %1694
      %v1696 = vsel %vm681, %v1623, 0.0
      %v1697 = vadd.f32 %v1622, %v1696
      %1698 = vadd.xlane.f32.xlu0 %v1697
      %v1699 = vpop.xlane.xlu0 %1698
      %v1700 = vsel %vm681, %v1625, 0.0
      %v1701 = vadd.f32 %v1624, %v1700
      %1702 = vadd.xlane.f32.xlu0 %v1701
      %v1703 = vpop.xlane.xlu0 %1702
      %v1704 = vsel %vm681, %v1627, 0.0
      %v1705 = vadd.f32 %v1626, %v1704
      %1706 = vadd.xlane.f32.xlu0 %v1705
      %v1707 = vpop.xlane.xlu0 %1706
      %v1708 = vsel %vm681, %v1629, 0.0
      %v1709 = vadd.f32 %v1628, %v1708
      %1710 = vadd.xlane.f32.xlu0 %v1709
      %v1711 = vpop.xlane.xlu0 %1710
      %v1712 = vsel %vm681, %v1631, 0.0
      %v1713 = vadd.f32 %v1630, %v1712
      %1714 = vadd.xlane.f32.xlu0 %v1713
      %v1715 = vpop.xlane.xlu0 %1714
      %v1716 = vsel %vm681, %v1633, 0.0
      %v1717 = vadd.f32 %v1632, %v1716
      %1718 = vadd.xlane.f32.xlu0 %v1717
      %v1719 = vpop.xlane.xlu0 %1718
      %v1720 = vsel %vm681, %v1635, 0.0
      %v1721 = vadd.f32 %v1634, %v1720
      %1722 = vadd.xlane.f32.xlu0 %v1721
      %v1723 = vpop.xlane.xlu0 %1722
      %v1724 = vsel %vm681, %v1637, 0.0
      %v1725 = vadd.f32 %v1636, %v1724
      %1726 = vadd.xlane.f32.xlu0 %v1725
      %v1727 = vpop.xlane.xlu0 %1726
      %v1728 = vsel %vm681, %v1639, 0.0
      %v1729 = vadd.f32 %v1638, %v1728
      %1730 = vadd.xlane.f32.xlu0 %v1729
      %v1731 = vpop.xlane.xlu0 %1730
      %v1732 = vsel %vm681, %v1641, 0.0
      %v1733 = vadd.f32 %v1640, %v1732
      %1734 = vadd.xlane.f32.xlu0 %v1733
      %v1735 = vpop.xlane.xlu0 %1734
      %v1736 = vsel %vm681, %v1643, 0.0
      %v1737 = vadd.f32 %v1642, %v1736
      %1738 = vadd.xlane.f32.xlu0 %v1737
      %v1739 = vpop.xlane.xlu0 %1738
      %v1740 = vsel %vm681, %v1645, 0.0
      %v1741 = vadd.f32 %v1644, %v1740
      %1742 = vadd.xlane.f32.xlu0 %v1741
      %v1743 = vpop.xlane.xlu0 %1742
      %v1744 = vsel %vm681, %v1647, 0.0
      %v1745 = vadd.f32 %v1646, %v1744
      %1746 = vadd.xlane.f32.xlu0 %v1745
      %v1747 = vpop.xlane.xlu0 %1746
      %v1748 = vsel %vm681, %v1649, 0.0
      %v1749 = vadd.f32 %v1648, %v1748
      %1750 = vadd.xlane.f32.xlu0 %v1749
      %v1751 = vpop.xlane.xlu0 %1750
      %v1752 = vsel %vm681, %v1651, 0.0
      %v1753 = vadd.f32 %v1650, %v1752
      %1754 = vadd.xlane.f32.xlu0 %v1753
      %v1755 = vpop.xlane.xlu0 %1754
      %v1756 = vsel %vm681, %v1653, 0.0
      %v1757 = vadd.f32 %v1652, %v1756
      %1758 = vadd.xlane.f32.xlu0 %v1757
      %v1759 = vpop.xlane.xlu0 %1758
      %v1760 = vsel %vm681, %v1655, 0.0
      %v1761 = vadd.f32 %v1654, %v1760
      %1762 = vadd.xlane.f32.xlu0 %v1761
      %v1763 = vpop.xlane.xlu0 %1762
      %v1764 = vsel %vm681, %v1657, 0.0
      %v1765 = vadd.f32 %v1656, %v1764
      %1766 = vadd.xlane.f32.xlu0 %v1765
      %v1767 = vpop.xlane.xlu0 %1766
      %v1768 = vsel %vm681, %v1659, 0.0
      %v1769 = vadd.f32 %v1658, %v1768
      %1770 = vadd.xlane.f32.xlu0 %v1769
      %v1771 = vpop.xlane.xlu0 %1770
      %v1772 = vsel %vm681, %v1661, 0.0
      %v1773 = vadd.f32 %v1660, %v1772
      %1774 = vadd.xlane.f32.xlu0 %v1773
      %v1775 = vpop.xlane.xlu0 %1774
      %v1776 = vsel %vm681, %v1663, 0.0
      %v1777 = vadd.f32 %v1662, %v1776
      %1778 = vadd.xlane.f32.xlu0 %v1777
      %v1779 = vpop.xlane.xlu0 %1778
      %v1780 = vsel %vm681, %v1665, 0.0
      %v1781 = vadd.f32 %v1664, %v1780
      %1782 = vadd.xlane.f32.xlu0 %v1781
      %v1783 = vpop.xlane.xlu0 %1782
      %v1784 = vsel %vm681, %v1667, 0.0
      %v1785 = vadd.f32 %v1666, %v1784
      %1786 = vadd.xlane.f32.xlu0 %v1785
      %v1787 = vpop.xlane.xlu0 %1786
      %v1788 = vsel %vm681, %v1669, 0.0
      %v1789 = vadd.f32 %v1668, %v1788
      %1790 = vadd.xlane.f32.xlu0 %v1789
      %v1791 = vpop.xlane.xlu0 %1790
      %v1792 = vsel %vm681, %v1671, 0.0
      %v1793 = vadd.f32 %v1670, %v1792
      %1794 = vadd.xlane.f32.xlu0 %v1793
      %v1795 = vpop.xlane.xlu0 %1794
      %v1796 = vsel %vm681, %v1673, 0.0
      %v1797 = vadd.f32 %v1672, %v1796
      %1798 = vadd.xlane.f32.xlu0 %v1797
      %v1799 = vpop.xlane.xlu0 %1798
      %v1800 = vsel %vm681, %v1675, 0.0
      %v1801 = vadd.f32 %v1674, %v1800
      %1802 = vadd.xlane.f32.xlu0 %v1801
      %v1803 = vpop.xlane.xlu0 %1802
      %v1804 = vmul.f32 %v1487, %v1487
      %v1805 = vmul.f32 %v1491, %v1491
      %v1806 = vmul.f32 %v1495, %v1495
      %v1807 = vmul.f32 %v1499, %v1499
      %v1808 = vmul.f32 %v1503, %v1503
      %v1809 = vmul.f32 %v1507, %v1507
      %v1810 = vmul.f32 %v1511, %v1511
      %v1811 = vmul.f32 %v1515, %v1515
      %v1812 = vmul.f32 %v1519, %v1519
      %v1813 = vmul.f32 %v1523, %v1523
      %v1814 = vmul.f32 %v1527, %v1527
      %v1815 = vmul.f32 %v1531, %v1531
      %v1816 = vmul.f32 %v1535, %v1535
      %v1817 = vmul.f32 %v1539, %v1539
      %v1818 = vmul.f32 %v1543, %v1543
      %v1819 = vmul.f32 %v1547, %v1547
      %v1820 = vmul.f32 %v1551, %v1551
      %v1821 = vmul.f32 %v1555, %v1555
      %v1822 = vmul.f32 %v1559, %v1559
      %v1823 = vmul.f32 %v1563, %v1563
      %v1824 = vmul.f32 %v1567, %v1567
      %v1825 = vmul.f32 %v1571, %v1571
      %v1826 = vmul.f32 %v1575, %v1575
      %v1827 = vmul.f32 %v1579, %v1579
      %v1828 = vmul.f32 %v1583, %v1583
      %v1829 = vmul.f32 %v1587, %v1587
      %v1830 = vmul.f32 %v1591, %v1591
      %v1831 = vmul.f32 %v1595, %v1595
      %v1832 = vmul.f32 %v1599, %v1599
      %v1833 = vmul.f32 %v1603, %v1603
      %v1834 = vmul.f32 %v1607, %v1607
      %v1835 = vmul.f32 %v1611, %v1611
      %v1836 = vsub.f32 %v1804, %v1679
      %v1837 = vsub.f32 %v1805, %v1683
      %v1838 = vsub.f32 %v1806, %v1687
      %v1839 = vsub.f32 %v1807, %v1691
      %v1840 = vsub.f32 %v1808, %v1695
      %v1841 = vsub.f32 %v1809, %v1699
      %v1842 = vsub.f32 %v1810, %v1703
      %v1843 = vsub.f32 %v1811, %v1707
      %v1844 = vsub.f32 %v1812, %v1711
      %v1845 = vsub.f32 %v1813, %v1715
      %v1846 = vsub.f32 %v1814, %v1719
      %v1847 = vsub.f32 %v1815, %v1723
      %v1848 = vsub.f32 %v1816, %v1727
      %v1849 = vsub.f32 %v1817, %v1731
      %v1850 = vsub.f32 %v1818, %v1735
      %v1851 = vsub.f32 %v1819, %v1739
      %v1852 = vsub.f32 %v1820, %v1743
      %v1853 = vsub.f32 %v1821, %v1747
      %v1854 = vsub.f32 %v1822, %v1751
      %v1855 = vsub.f32 %v1823, %v1755
      %v1856 = vsub.f32 %v1824, %v1759
      %v1857 = vsub.f32 %v1825, %v1763
      %v1858 = vsub.f32 %v1826, %v1767
      %v1859 = vsub.f32 %v1827, %v1771
      %v1860 = vsub.f32 %v1828, %v1775
      %v1861 = vsub.f32 %v1829, %v1779
      %v1862 = vsub.f32 %v1830, %v1783
      %v1863 = vsub.f32 %v1831, %v1787
      %v1864 = vsub.f32 %v1832, %v1791
      %v1865 = vsub.f32 %v1833, %v1795
      %v1866 = vsub.f32 %v1834, %v1799
      %v1867 = vsub.f32 %v1835, %v1803
      %v1868 = vmul.f32 %v1836, 0.5
      %v1869 = vmul.f32 %v1837, 0.5
      %v1870 = vmul.f32 %v1838, 0.5
      %v1871 = vmul.f32 %v1839, 0.5
      %v1872 = vmul.f32 %v1840, 0.5
      %v1873 = vmul.f32 %v1841, 0.5
      %v1874 = vmul.f32 %v1842, 0.5
      %v1875 = vmul.f32 %v1843, 0.5
      %v1876 = vmul.f32 %v1844, 0.5
      %v1877 = vmul.f32 %v1845, 0.5
      %v1878 = vmul.f32 %v1846, 0.5
      %v1879 = vmul.f32 %v1847, 0.5
      %v1880 = vmul.f32 %v1848, 0.5
      %v1881 = vmul.f32 %v1849, 0.5
      %v1882 = vmul.f32 %v1850, 0.5
      %v1883 = vmul.f32 %v1851, 0.5
      %v1884 = vmul.f32 %v1852, 0.5
      %v1885 = vmul.f32 %v1853, 0.5
      %v1886 = vmul.f32 %v1854, 0.5
      %v1887 = vmul.f32 %v1855, 0.5
      %v1888 = vmul.f32 %v1856, 0.5
      %v1889 = vmul.f32 %v1857, 0.5
      %v1890 = vmul.f32 %v1858, 0.5
      %v1891 = vmul.f32 %v1859, 0.5
      %v1892 = vmul.f32 %v1860, 0.5
      %v1893 = vmul.f32 %v1861, 0.5
      %v1894 = vmul.f32 %v1862, 0.5
      %v1895 = vmul.f32 %v1863, 0.5
      %v1896 = vmul.f32 %v1864, 0.5
      %v1897 = vmul.f32 %v1865, 0.5
      %v1898 = vmul.f32 %v1866, 0.5
      %v1899 = vmul.f32 %v1867, 0.5
      %v1900 = vadd.f32 %v1452, %v1868
      %v1901 = vadd.f32 %v1453, %v1869
      %v1902 = vadd.f32 %v1454, %v1870
      %v1903 = vadd.f32 %v1455, %v1871
      %v1904 = vadd.f32 %v1456, %v1872
      %v1905 = vadd.f32 %v1457, %v1873
      %v1906 = vadd.f32 %v1458, %v1874
      %v1907 = vadd.f32 %v1459, %v1875
      %v1908 = vadd.f32 %v1460, %v1876
      %v1909 = vadd.f32 %v1461, %v1877
      %v1910 = vadd.f32 %v1462, %v1878
      %v1911 = vadd.f32 %v1463, %v1879
      %v1912 = vadd.f32 %v1464, %v1880
      %v1913 = vadd.f32 %v1465, %v1881
      %v1914 = vadd.f32 %v1466, %v1882
      %v1915 = vadd.f32 %v1467, %v1883
      %v1916 = vadd.f32 %v1468, %v1884
      %v1917 = vadd.f32 %v1469, %v1885
      %v1918 = vadd.f32 %v1470, %v1886
      %v1919 = vadd.f32 %v1471, %v1887
      %v1920 = vadd.f32 %v1472, %v1888
      %v1921 = vadd.f32 %v1473, %v1889
      %v1922 = vadd.f32 %v1474, %v1890
      %v1923 = vadd.f32 %v1475, %v1891
      %v1924 = vadd.f32 %v1476, %v1892
      %v1925 = vadd.f32 %v1477, %v1893
      %v1926 = vadd.f32 %v1478, %v1894
      %v1927 = vadd.f32 %v1479, %v1895
      %v1928 = vadd.f32 %v1480, %v1896
      %v1929 = vadd.f32 %v1481, %v1897
      %v1930 = vadd.f32 %v1482, %v1898
      %v1931 = vadd.f32 %v1483, %v1899
      %v1932 = vxor.u32 %v1900, 2147483648
      %v1933 = vxor.u32 %v1901, 2147483648
      %v1934 = vxor.u32 %v1902, 2147483648
      %v1935 = vxor.u32 %v1903, 2147483648
      %v1936 = vxor.u32 %v1904, 2147483648
      %v1937 = vxor.u32 %v1905, 2147483648
      %v1938 = vxor.u32 %v1906, 2147483648
      %v1939 = vxor.u32 %v1907, 2147483648
      %v1940 = vxor.u32 %v1908, 2147483648
      %v1941 = vxor.u32 %v1909, 2147483648
      %v1942 = vxor.u32 %v1910, 2147483648
      %v1943 = vxor.u32 %v1911, 2147483648
      %v1944 = vxor.u32 %v1912, 2147483648
      %v1945 = vxor.u32 %v1913, 2147483648
      %v1946 = vxor.u32 %v1914, 2147483648
      %v1947 = vxor.u32 %v1915, 2147483648
      %v1948 = vxor.u32 %v1916, 2147483648
      %v1949 = vxor.u32 %v1917, 2147483648
      %v1950 = vxor.u32 %v1918, 2147483648
      %v1951 = vxor.u32 %v1919, 2147483648
      %v1952 = vxor.u32 %v1920, 2147483648
      %v1953 = vxor.u32 %v1921, 2147483648
      %v1954 = vxor.u32 %v1922, 2147483648
      %v1955 = vxor.u32 %v1923, 2147483648
      %v1956 = vxor.u32 %v1924, 2147483648
      %v1957 = vxor.u32 %v1925, 2147483648
      %v1958 = vxor.u32 %v1926, 2147483648
      %v1959 = vxor.u32 %v1927, 2147483648
      %v1960 = vxor.u32 %v1928, 2147483648
      %v1961 = vxor.u32 %v1929, 2147483648
      %v1962 = vxor.u32 %v1930, 2147483648
      %v1963 = vxor.u32 %v1931, 2147483648
      %v1964 = vmul.f32 %v1932, 1.442695
      %v1965 = vpow.pop %v1964
      %v1966 = vmul.f32 %v1933, 1.442695
      %v1967 = vpow.pop %v1966
      %v1968 = vmul.f32 %v1934, 1.442695
      %v1969 = vpow.pop %v1968
      %v1970 = vmul.f32 %v1935, 1.442695
      %v1971 = vpow.pop %v1970
      %v1972 = vmul.f32 %v1936, 1.442695
      %v1973 = vpow.pop %v1972
      %v1974 = vmul.f32 %v1937, 1.442695
      %v1975 = vpow.pop %v1974
      %v1976 = vmul.f32 %v1938, 1.442695
      %v1977 = vpow.pop %v1976
      %v1978 = vmul.f32 %v1939, 1.442695
      %v1979 = vpow.pop %v1978
      %v1980 = vmul.f32 %v1940, 1.442695
      %v1981 = vpow.pop %v1980
      %v1982 = vmul.f32 %v1941, 1.442695
      %v1983 = vpow.pop %v1982
      %v1984 = vmul.f32 %v1942, 1.442695
      %v1985 = vpow.pop %v1984
      %v1986 = vmul.f32 %v1943, 1.442695
      %v1987 = vpow.pop %v1986
      %v1988 = vmul.f32 %v1944, 1.442695
      %v1989 = vpow.pop %v1988
      %v1990 = vmul.f32 %v1945, 1.442695
      %v1991 = vpow.pop %v1990
      %v1992 = vmul.f32 %v1946, 1.442695
      %v1993 = vpow.pop %v1992
      %v1994 = vmul.f32 %v1947, 1.442695
      %v1995 = vpow.pop %v1994
      %v1996 = vmul.f32 %v1948, 1.442695
      %v1997 = vpow.pop %v1996
      %v1998 = vmul.f32 %v1949, 1.442695
      %v1999 = vpow.pop %v1998
      %v2000 = vmul.f32 %v1950, 1.442695
      %v2001 = vpow.pop %v2000
      %v2002 = vmul.f32 %v1951, 1.442695
      %v2003 = vpow.pop %v2002
      %v2004 = vmul.f32 %v1952, 1.442695
      %v2005 = vpow.pop %v2004
      %v2006 = vmul.f32 %v1953, 1.442695
      %v2007 = vpow.pop %v2006
      %v2008 = vmul.f32 %v1954, 1.442695
      %v2009 = vpow.pop %v2008
      %v2010 = vmul.f32 %v1955, 1.442695
      %v2011 = vpow.pop %v2010
      %v2012 = vmul.f32 %v1956, 1.442695
      %v2013 = vpow.pop %v2012
      %v2014 = vmul.f32 %v1957, 1.442695
      %v2015 = vpow.pop %v2014
      %v2016 = vmul.f32 %v1958, 1.442695
      %v2017 = vpow.pop %v2016
      %v2018 = vmul.f32 %v1959, 1.442695
      %v2019 = vpow.pop %v2018
      %v2020 = vmul.f32 %v1960, 1.442695
      %v2021 = vpow.pop %v2020
      %v2022 = vmul.f32 %v1961, 1.442695
      %v2023 = vpow.pop %v2022
      %v2024 = vmul.f32 %v1962, 1.442695
      %v2025 = vpow.pop %v2024
      %v2026 = vmul.f32 %v1963, 1.442695
      %v2027 = vpow.pop %v2026
      %v2028 = vadd.f32 %v1965, 1.0
      %v2029 = vadd.f32 %v1967, 1.0
      %v2030 = vadd.f32 %v1969, 1.0
      %v2031 = vadd.f32 %v1971, 1.0
      %v2032 = vadd.f32 %v1973, 1.0
      %v2033 = vadd.f32 %v1975, 1.0
      %v2034 = vadd.f32 %v1977, 1.0
      %v2035 = vadd.f32 %v1979, 1.0
      %v2036 = vadd.f32 %v1981, 1.0
      %v2037 = vadd.f32 %v1983, 1.0
      %v2038 = vadd.f32 %v1985, 1.0
      %v2039 = vadd.f32 %v1987, 1.0
      %v2040 = vadd.f32 %v1989, 1.0
      %v2041 = vadd.f32 %v1991, 1.0
      %v2042 = vadd.f32 %v1993, 1.0
      %v2043 = vadd.f32 %v1995, 1.0
      %v2044 = vadd.f32 %v1997, 1.0
      %v2045 = vadd.f32 %v1999, 1.0
      %v2046 = vadd.f32 %v2001, 1.0
      %v2047 = vadd.f32 %v2003, 1.0
      %v2048 = vadd.f32 %v2005, 1.0
      %v2049 = vadd.f32 %v2007, 1.0
      %v2050 = vadd.f32 %v2009, 1.0
      %v2051 = vadd.f32 %v2011, 1.0
      %v2052 = vadd.f32 %v2013, 1.0
      %v2053 = vadd.f32 %v2015, 1.0
      %v2054 = vadd.f32 %v2017, 1.0
      %v2055 = vadd.f32 %v2019, 1.0
      %v2056 = vadd.f32 %v2021, 1.0
      %v2057 = vadd.f32 %v2023, 1.0
      %v2058 = vadd.f32 %v2025, 1.0
      %v2059 = vadd.f32 %v2027, 1.0
      %v2060 = vrcp.pop %v2028
      %v2061 = vmul.f32 %v2028, %v2060
      %v2062 = vsub.f32 1.0, %v2061
      %v2063 = vmul.f32 %v2060, %v2062
      %v2064 = vadd.f32 %v2060, %v2063
      %vm2065 = vweird.f32 %v2028
      %vm2066 = vweird.f32 %v2060
      %vm2067 = vmor %vm2065, %vm2066
      %v2068 = vsel %vm2067, %v2060, %v2064
      %v2069 = vand.u32 2147483647, %v2028
      %vm2070 = vcmp.eq.f32.partialorder %v2069, 8.507059e+37
      %v2071 = vand.u32 %v2028, 2147483648
      %v2072 = vor.u32 1.1754944e-38, %v2071
      %v2073 = vsel %vm2070, %v2072, %v2068
      %v2074 = vmul.f32 1.0, %v2073
      %v2075 = vrcp.pop %v2029
      %v2076 = vmul.f32 %v2029, %v2075
      %v2077 = vsub.f32 1.0, %v2076
      %v2078 = vmul.f32 %v2075, %v2077
      %v2079 = vadd.f32 %v2075, %v2078
      %vm2080 = vweird.f32 %v2029
      %vm2081 = vweird.f32 %v2075
      %vm2082 = vmor %vm2080, %vm2081
      %v2083 = vsel %vm2082, %v2075, %v2079
      %v2084 = vand.u32 2147483647, %v2029
      %vm2085 = vcmp.eq.f32.partialorder %v2084, 8.507059e+37
      %v2086 = vand.u32 %v2029, 2147483648
      %v2087 = vor.u32 1.1754944e-38, %v2086
      %v2088 = vsel %vm2085, %v2087, %v2083
      %v2089 = vmul.f32 1.0, %v2088
      %v2090 = vrcp.pop %v2030
      %v2091 = vmul.f32 %v2030, %v2090
      %v2092 = vsub.f32 1.0, %v2091
      %v2093 = vmul.f32 %v2090, %v2092
      %v2094 = vadd.f32 %v2090, %v2093
      %vm2095 = vweird.f32 %v2030
      %vm2096 = vweird.f32 %v2090
      %vm2097 = vmor %vm2095, %vm2096
      %v2098 = vsel %vm2097, %v2090, %v2094
      %v2099 = vand.u32 2147483647, %v2030
      %vm2100 = vcmp.eq.f32.partialorder %v2099, 8.507059e+37
      %v2101 = vand.u32 %v2030, 2147483648
      %v2102 = vor.u32 1.1754944e-38, %v2101
      %v2103 = vsel %vm2100, %v2102, %v2098
      %v2104 = vmul.f32 1.0, %v2103
      %v2105 = vrcp.pop %v2031
      %v2106 = vmul.f32 %v2031, %v2105
      %v2107 = vsub.f32 1.0, %v2106
      %v2108 = vmul.f32 %v2105, %v2107
      %v2109 = vadd.f32 %v2105, %v2108
      %vm2110 = vweird.f32 %v2031
      %vm2111 = vweird.f32 %v2105
      %vm2112 = vmor %vm2110, %vm2111
      %v2113 = vsel %vm2112, %v2105, %v2109
      %v2114 = vand.u32 2147483647, %v2031
      %vm2115 = vcmp.eq.f32.partialorder %v2114, 8.507059e+37
      %v2116 = vand.u32 %v2031, 2147483648
      %v2117 = vor.u32 1.1754944e-38, %v2116
      %v2118 = vsel %vm2115, %v2117, %v2113
      %v2119 = vmul.f32 1.0, %v2118
      %v2120 = vrcp.pop %v2032
      %v2121 = vmul.f32 %v2032, %v2120
      %v2122 = vsub.f32 1.0, %v2121
      %v2123 = vmul.f32 %v2120, %v2122
      %v2124 = vadd.f32 %v2120, %v2123
      %vm2125 = vweird.f32 %v2032
      %vm2126 = vweird.f32 %v2120
      %vm2127 = vmor %vm2125, %vm2126
      %v2128 = vsel %vm2127, %v2120, %v2124
      %v2129 = vand.u32 2147483647, %v2032
      %vm2130 = vcmp.eq.f32.partialorder %v2129, 8.507059e+37
      %v2131 = vand.u32 %v2032, 2147483648
      %v2132 = vor.u32 1.1754944e-38, %v2131
      %v2133 = vsel %vm2130, %v2132, %v2128
      %v2134 = vmul.f32 1.0, %v2133
      %v2135 = vrcp.pop %v2033
      %v2136 = vmul.f32 %v2033, %v2135
      %v2137 = vsub.f32 1.0, %v2136
      %v2138 = vmul.f32 %v2135, %v2137
      %v2139 = vadd.f32 %v2135, %v2138
      %vm2140 = vweird.f32 %v2033
      %vm2141 = vweird.f32 %v2135
      %vm2142 = vmor %vm2140, %vm2141
      %v2143 = vsel %vm2142, %v2135, %v2139
      %v2144 = vand.u32 2147483647, %v2033
      %vm2145 = vcmp.eq.f32.partialorder %v2144, 8.507059e+37
      %v2146 = vand.u32 %v2033, 2147483648
      %v2147 = vor.u32 1.1754944e-38, %v2146
      %v2148 = vsel %vm2145, %v2147, %v2143
      %v2149 = vmul.f32 1.0, %v2148
      %v2150 = vrcp.pop %v2034
      %v2151 = vmul.f32 %v2034, %v2150
      %v2152 = vsub.f32 1.0, %v2151
      %v2153 = vmul.f32 %v2150, %v2152
      %v2154 = vadd.f32 %v2150, %v2153
      %vm2155 = vweird.f32 %v2034
      %vm2156 = vweird.f32 %v2150
      %vm2157 = vmor %vm2155, %vm2156
      %v2158 = vsel %vm2157, %v2150, %v2154
      %v2159 = vand.u32 2147483647, %v2034
      %vm2160 = vcmp.eq.f32.partialorder %v2159, 8.507059e+37
      %v2161 = vand.u32 %v2034, 2147483648
      %v2162 = vor.u32 1.1754944e-38, %v2161
      %v2163 = vsel %vm2160, %v2162, %v2158
      %v2164 = vmul.f32 1.0, %v2163
      %v2165 = vrcp.pop %v2035
      %v2166 = vmul.f32 %v2035, %v2165
      %v2167 = vsub.f32 1.0, %v2166
      %v2168 = vmul.f32 %v2165, %v2167
      %v2169 = vadd.f32 %v2165, %v2168
      %vm2170 = vweird.f32 %v2035
      %vm2171 = vweird.f32 %v2165
      %vm2172 = vmor %vm2170, %vm2171
      %v2173 = vsel %vm2172, %v2165, %v2169
      %v2174 = vand.u32 2147483647, %v2035
      %vm2175 = vcmp.eq.f32.partialorder %v2174, 8.507059e+37
      %v2176 = vand.u32 %v2035, 2147483648
      %v2177 = vor.u32 1.1754944e-38, %v2176
      %v2178 = vsel %vm2175, %v2177, %v2173
      %v2179 = vmul.f32 1.0, %v2178
      %v2180 = vrcp.pop %v2036
      %v2181 = vmul.f32 %v2036, %v2180
      %v2182 = vsub.f32 1.0, %v2181
      %v2183 = vmul.f32 %v2180, %v2182
      %v2184 = vadd.f32 %v2180, %v2183
      %vm2185 = vweird.f32 %v2036
      %vm2186 = vweird.f32 %v2180
      %vm2187 = vmor %vm2185, %vm2186
      %v2188 = vsel %vm2187, %v2180, %v2184
      %v2189 = vand.u32 2147483647, %v2036
      %vm2190 = vcmp.eq.f32.partialorder %v2189, 8.507059e+37
      %v2191 = vand.u32 %v2036, 2147483648
      %v2192 = vor.u32 1.1754944e-38, %v2191
      %v2193 = vsel %vm2190, %v2192, %v2188
      %v2194 = vmul.f32 1.0, %v2193
      %v2195 = vrcp.pop %v2037
      %v2196 = vmul.f32 %v2037, %v2195
      %v2197 = vsub.f32 1.0, %v2196
      %v2198 = vmul.f32 %v2195, %v2197
      %v2199 = vadd.f32 %v2195, %v2198
      %vm2200 = vweird.f32 %v2037
      %vm2201 = vweird.f32 %v2195
      %vm2202 = vmor %vm2200, %vm2201
      %v2203 = vsel %vm2202, %v2195, %v2199
      %v2204 = vand.u32 2147483647, %v2037
      %vm2205 = vcmp.eq.f32.partialorder %v2204, 8.507059e+37
      %v2206 = vand.u32 %v2037, 2147483648
      %v2207 = vor.u32 1.1754944e-38, %v2206
      %v2208 = vsel %vm2205, %v2207, %v2203
      %v2209 = vmul.f32 1.0, %v2208
      %v2210 = vrcp.pop %v2038
      %v2211 = vmul.f32 %v2038, %v2210
      %v2212 = vsub.f32 1.0, %v2211
      %v2213 = vmul.f32 %v2210, %v2212
      %v2214 = vadd.f32 %v2210, %v2213
      %vm2215 = vweird.f32 %v2038
      %vm2216 = vweird.f32 %v2210
      %vm2217 = vmor %vm2215, %vm2216
      %v2218 = vsel %vm2217, %v2210, %v2214
      %v2219 = vand.u32 2147483647, %v2038
      %vm2220 = vcmp.eq.f32.partialorder %v2219, 8.507059e+37
      %v2221 = vand.u32 %v2038, 2147483648
      %v2222 = vor.u32 1.1754944e-38, %v2221
      %v2223 = vsel %vm2220, %v2222, %v2218
      %v2224 = vmul.f32 1.0, %v2223
      %v2225 = vrcp.pop %v2039
      %v2226 = vmul.f32 %v2039, %v2225
      %v2227 = vsub.f32 1.0, %v2226
      %v2228 = vmul.f32 %v2225, %v2227
      %v2229 = vadd.f32 %v2225, %v2228
      %vm2230 = vweird.f32 %v2039
      %vm2231 = vweird.f32 %v2225
      %vm2232 = vmor %vm2230, %vm2231
      %v2233 = vsel %vm2232, %v2225, %v2229
      %v2234 = vand.u32 2147483647, %v2039
      %vm2235 = vcmp.eq.f32.partialorder %v2234, 8.507059e+37
      %v2236 = vand.u32 %v2039, 2147483648
      %v2237 = vor.u32 1.1754944e-38, %v2236
      %v2238 = vsel %vm2235, %v2237, %v2233
      %v2239 = vmul.f32 1.0, %v2238
      %v2240 = vrcp.pop %v2040
      %v2241 = vmul.f32 %v2040, %v2240
      %v2242 = vsub.f32 1.0, %v2241
      %v2243 = vmul.f32 %v2240, %v2242
      %v2244 = vadd.f32 %v2240, %v2243
      %vm2245 = vweird.f32 %v2040
      %vm2246 = vweird.f32 %v2240
      %vm2247 = vmor %vm2245, %vm2246
      %v2248 = vsel %vm2247, %v2240, %v2244
      %v2249 = vand.u32 2147483647, %v2040
      %vm2250 = vcmp.eq.f32.partialorder %v2249, 8.507059e+37
      %v2251 = vand.u32 %v2040, 2147483648
      %v2252 = vor.u32 1.1754944e-38, %v2251
      %v2253 = vsel %vm2250, %v2252, %v2248
      %v2254 = vmul.f32 1.0, %v2253
      %v2255 = vrcp.pop %v2041
      %v2256 = vmul.f32 %v2041, %v2255
      %v2257 = vsub.f32 1.0, %v2256
      %v2258 = vmul.f32 %v2255, %v2257
      %v2259 = vadd.f32 %v2255, %v2258
      %vm2260 = vweird.f32 %v2041
      %vm2261 = vweird.f32 %v2255
      %vm2262 = vmor %vm2260, %vm2261
      %v2263 = vsel %vm2262, %v2255, %v2259
      %v2264 = vand.u32 2147483647, %v2041
      %vm2265 = vcmp.eq.f32.partialorder %v2264, 8.507059e+37
      %v2266 = vand.u32 %v2041, 2147483648
      %v2267 = vor.u32 1.1754944e-38, %v2266
      %v2268 = vsel %vm2265, %v2267, %v2263
      %v2269 = vmul.f32 1.0, %v2268
      %v2270 = vrcp.pop %v2042
      %v2271 = vmul.f32 %v2042, %v2270
      %v2272 = vsub.f32 1.0, %v2271
      %v2273 = vmul.f32 %v2270, %v2272
      %v2274 = vadd.f32 %v2270, %v2273
      %vm2275 = vweird.f32 %v2042
      %vm2276 = vweird.f32 %v2270
      %vm2277 = vmor %vm2275, %vm2276
      %v2278 = vsel %vm2277, %v2270, %v2274
      %v2279 = vand.u32 2147483647, %v2042
      %vm2280 = vcmp.eq.f32.partialorder %v2279, 8.507059e+37
      %v2281 = vand.u32 %v2042, 2147483648
      %v2282 = vor.u32 1.1754944e-38, %v2281
      %v2283 = vsel %vm2280, %v2282, %v2278
      %v2284 = vmul.f32 1.0, %v2283
      %v2285 = vrcp.pop %v2043
      %v2286 = vmul.f32 %v2043, %v2285
      %v2287 = vsub.f32 1.0, %v2286
      %v2288 = vmul.f32 %v2285, %v2287
      %v2289 = vadd.f32 %v2285, %v2288
      %vm2290 = vweird.f32 %v2043
      %vm2291 = vweird.f32 %v2285
      %vm2292 = vmor %vm2290, %vm2291
      %v2293 = vsel %vm2292, %v2285, %v2289
      %v2294 = vand.u32 2147483647, %v2043
      %vm2295 = vcmp.eq.f32.partialorder %v2294, 8.507059e+37
      %v2296 = vand.u32 %v2043, 2147483648
      %v2297 = vor.u32 1.1754944e-38, %v2296
      %v2298 = vsel %vm2295, %v2297, %v2293
      %v2299 = vmul.f32 1.0, %v2298
      %v2300 = vrcp.pop %v2044
      %v2301 = vmul.f32 %v2044, %v2300
      %v2302 = vsub.f32 1.0, %v2301
      %v2303 = vmul.f32 %v2300, %v2302
      %v2304 = vadd.f32 %v2300, %v2303
      %vm2305 = vweird.f32 %v2044
      %vm2306 = vweird.f32 %v2300
      %vm2307 = vmor %vm2305, %vm2306
      %v2308 = vsel %vm2307, %v2300, %v2304
      %v2309 = vand.u32 2147483647, %v2044
      %vm2310 = vcmp.eq.f32.partialorder %v2309, 8.507059e+37
      %v2311 = vand.u32 %v2044, 2147483648
      %v2312 = vor.u32 1.1754944e-38, %v2311
      %v2313 = vsel %vm2310, %v2312, %v2308
      %v2314 = vmul.f32 1.0, %v2313
      %v2315 = vrcp.pop %v2045
      %v2316 = vmul.f32 %v2045, %v2315
      %v2317 = vsub.f32 1.0, %v2316
      %v2318 = vmul.f32 %v2315, %v2317
      %v2319 = vadd.f32 %v2315, %v2318
      %vm2320 = vweird.f32 %v2045
      %vm2321 = vweird.f32 %v2315
      %vm2322 = vmor %vm2320, %vm2321
      %v2323 = vsel %vm2322, %v2315, %v2319
      %v2324 = vand.u32 2147483647, %v2045
      %vm2325 = vcmp.eq.f32.partialorder %v2324, 8.507059e+37
      %v2326 = vand.u32 %v2045, 2147483648
      %v2327 = vor.u32 1.1754944e-38, %v2326
      %v2328 = vsel %vm2325, %v2327, %v2323
      %v2329 = vmul.f32 1.0, %v2328
      %v2330 = vrcp.pop %v2046
      %v2331 = vmul.f32 %v2046, %v2330
      %v2332 = vsub.f32 1.0, %v2331
      %v2333 = vmul.f32 %v2330, %v2332
      %v2334 = vadd.f32 %v2330, %v2333
      %vm2335 = vweird.f32 %v2046
      %vm2336 = vweird.f32 %v2330
      %vm2337 = vmor %vm2335, %vm2336
      %v2338 = vsel %vm2337, %v2330, %v2334
      %v2339 = vand.u32 2147483647, %v2046
      %vm2340 = vcmp.eq.f32.partialorder %v2339, 8.507059e+37
      %v2341 = vand.u32 %v2046, 2147483648
      %v2342 = vor.u32 1.1754944e-38, %v2341
      %v2343 = vsel %vm2340, %v2342, %v2338
      %v2344 = vmul.f32 1.0, %v2343
      %v2345 = vrcp.pop %v2047
      %v2346 = vmul.f32 %v2047, %v2345
      %v2347 = vsub.f32 1.0, %v2346
      %v2348 = vmul.f32 %v2345, %v2347
      %v2349 = vadd.f32 %v2345, %v2348
      %vm2350 = vweird.f32 %v2047
      %vm2351 = vweird.f32 %v2345
      %vm2352 = vmor %vm2350, %vm2351
      %v2353 = vsel %vm2352, %v2345, %v2349
      %v2354 = vand.u32 2147483647, %v2047
      %vm2355 = vcmp.eq.f32.partialorder %v2354, 8.507059e+37
      %v2356 = vand.u32 %v2047, 2147483648
      %v2357 = vor.u32 1.1754944e-38, %v2356
      %v2358 = vsel %vm2355, %v2357, %v2353
      %v2359 = vmul.f32 1.0, %v2358
      %v2360 = vrcp.pop %v2048
      %v2361 = vmul.f32 %v2048, %v2360
      %v2362 = vsub.f32 1.0, %v2361
      %v2363 = vmul.f32 %v2360, %v2362
      %v2364 = vadd.f32 %v2360, %v2363
      %vm2365 = vweird.f32 %v2048
      %vm2366 = vweird.f32 %v2360
      %vm2367 = vmor %vm2365, %vm2366
      %v2368 = vsel %vm2367, %v2360, %v2364
      %v2369 = vand.u32 2147483647, %v2048
      %vm2370 = vcmp.eq.f32.partialorder %v2369, 8.507059e+37
      %v2371 = vand.u32 %v2048, 2147483648
      %v2372 = vor.u32 1.1754944e-38, %v2371
      %v2373 = vsel %vm2370, %v2372, %v2368
      %v2374 = vmul.f32 1.0, %v2373
      %v2375 = vrcp.pop %v2049
      %v2376 = vmul.f32 %v2049, %v2375
      %v2377 = vsub.f32 1.0, %v2376
      %v2378 = vmul.f32 %v2375, %v2377
      %v2379 = vadd.f32 %v2375, %v2378
      %vm2380 = vweird.f32 %v2049
      %vm2381 = vweird.f32 %v2375
      %vm2382 = vmor %vm2380, %vm2381
      %v2383 = vsel %vm2382, %v2375, %v2379
      %v2384 = vand.u32 2147483647, %v2049
      %vm2385 = vcmp.eq.f32.partialorder %v2384, 8.507059e+37
      %v2386 = vand.u32 %v2049, 2147483648
      %v2387 = vor.u32 1.1754944e-38, %v2386
      %v2388 = vsel %vm2385, %v2387, %v2383
      %v2389 = vmul.f32 1.0, %v2388
      %v2390 = vrcp.pop %v2050
      %v2391 = vmul.f32 %v2050, %v2390
      %v2392 = vsub.f32 1.0, %v2391
      %v2393 = vmul.f32 %v2390, %v2392
      %v2394 = vadd.f32 %v2390, %v2393
      %vm2395 = vweird.f32 %v2050
      %vm2396 = vweird.f32 %v2390
      %vm2397 = vmor %vm2395, %vm2396
      %v2398 = vsel %vm2397, %v2390, %v2394
      %v2399 = vand.u32 2147483647, %v2050
      %vm2400 = vcmp.eq.f32.partialorder %v2399, 8.507059e+37
      %v2401 = vand.u32 %v2050, 2147483648
      %v2402 = vor.u32 1.1754944e-38, %v2401
      %v2403 = vsel %vm2400, %v2402, %v2398
      %v2404 = vmul.f32 1.0, %v2403
      %v2405 = vrcp.pop %v2051
      %v2406 = vmul.f32 %v2051, %v2405
      %v2407 = vsub.f32 1.0, %v2406
      %v2408 = vmul.f32 %v2405, %v2407
      %v2409 = vadd.f32 %v2405, %v2408
      %vm2410 = vweird.f32 %v2051
      %vm2411 = vweird.f32 %v2405
      %vm2412 = vmor %vm2410, %vm2411
      %v2413 = vsel %vm2412, %v2405, %v2409
      %v2414 = vand.u32 2147483647, %v2051
      %vm2415 = vcmp.eq.f32.partialorder %v2414, 8.507059e+37
      %v2416 = vand.u32 %v2051, 2147483648
      %v2417 = vor.u32 1.1754944e-38, %v2416
      %v2418 = vsel %vm2415, %v2417, %v2413
      %v2419 = vmul.f32 1.0, %v2418
      %v2420 = vrcp.pop %v2052
      %v2421 = vmul.f32 %v2052, %v2420
      %v2422 = vsub.f32 1.0, %v2421
      %v2423 = vmul.f32 %v2420, %v2422
      %v2424 = vadd.f32 %v2420, %v2423
      %vm2425 = vweird.f32 %v2052
      %vm2426 = vweird.f32 %v2420
      %vm2427 = vmor %vm2425, %vm2426
      %v2428 = vsel %vm2427, %v2420, %v2424
      %v2429 = vand.u32 2147483647, %v2052
      %vm2430 = vcmp.eq.f32.partialorder %v2429, 8.507059e+37
      %v2431 = vand.u32 %v2052, 2147483648
      %v2432 = vor.u32 1.1754944e-38, %v2431
      %v2433 = vsel %vm2430, %v2432, %v2428
      %v2434 = vmul.f32 1.0, %v2433
      %v2435 = vrcp.pop %v2053
      %v2436 = vmul.f32 %v2053, %v2435
      %v2437 = vsub.f32 1.0, %v2436
      %v2438 = vmul.f32 %v2435, %v2437
      %v2439 = vadd.f32 %v2435, %v2438
      %vm2440 = vweird.f32 %v2053
      %vm2441 = vweird.f32 %v2435
      %vm2442 = vmor %vm2440, %vm2441
      %v2443 = vsel %vm2442, %v2435, %v2439
      %v2444 = vand.u32 2147483647, %v2053
      %vm2445 = vcmp.eq.f32.partialorder %v2444, 8.507059e+37
      %v2446 = vand.u32 %v2053, 2147483648
      %v2447 = vor.u32 1.1754944e-38, %v2446
      %v2448 = vsel %vm2445, %v2447, %v2443
      %v2449 = vmul.f32 1.0, %v2448
      %v2450 = vrcp.pop %v2054
      %v2451 = vmul.f32 %v2054, %v2450
      %v2452 = vsub.f32 1.0, %v2451
      %v2453 = vmul.f32 %v2450, %v2452
      %v2454 = vadd.f32 %v2450, %v2453
      %vm2455 = vweird.f32 %v2054
      %vm2456 = vweird.f32 %v2450
      %vm2457 = vmor %vm2455, %vm2456
      %v2458 = vsel %vm2457, %v2450, %v2454
      %v2459 = vand.u32 2147483647, %v2054
      %vm2460 = vcmp.eq.f32.partialorder %v2459, 8.507059e+37
      %v2461 = vand.u32 %v2054, 2147483648
      %v2462 = vor.u32 1.1754944e-38, %v2461
      %v2463 = vsel %vm2460, %v2462, %v2458
      %v2464 = vmul.f32 1.0, %v2463
      %v2465 = vrcp.pop %v2055
      %v2466 = vmul.f32 %v2055, %v2465
      %v2467 = vsub.f32 1.0, %v2466
      %v2468 = vmul.f32 %v2465, %v2467
      %v2469 = vadd.f32 %v2465, %v2468
      %vm2470 = vweird.f32 %v2055
      %vm2471 = vweird.f32 %v2465
      %vm2472 = vmor %vm2470, %vm2471
      %v2473 = vsel %vm2472, %v2465, %v2469
      %v2474 = vand.u32 2147483647, %v2055
      %vm2475 = vcmp.eq.f32.partialorder %v2474, 8.507059e+37
      %v2476 = vand.u32 %v2055, 2147483648
      %v2477 = vor.u32 1.1754944e-38, %v2476
      %v2478 = vsel %vm2475, %v2477, %v2473
      %v2479 = vmul.f32 1.0, %v2478
      %v2480 = vrcp.pop %v2056
      %v2481 = vmul.f32 %v2056, %v2480
      %v2482 = vsub.f32 1.0, %v2481
      %v2483 = vmul.f32 %v2480, %v2482
      %v2484 = vadd.f32 %v2480, %v2483
      %vm2485 = vweird.f32 %v2056
      %vm2486 = vweird.f32 %v2480
      %vm2487 = vmor %vm2485, %vm2486
      %v2488 = vsel %vm2487, %v2480, %v2484
      %v2489 = vand.u32 2147483647, %v2056
      %vm2490 = vcmp.eq.f32.partialorder %v2489, 8.507059e+37
      %v2491 = vand.u32 %v2056, 2147483648
      %v2492 = vor.u32 1.1754944e-38, %v2491
      %v2493 = vsel %vm2490, %v2492, %v2488
      %v2494 = vmul.f32 1.0, %v2493
      %v2495 = vrcp.pop %v2057
      %v2496 = vmul.f32 %v2057, %v2495
      %v2497 = vsub.f32 1.0, %v2496
      %v2498 = vmul.f32 %v2495, %v2497
      %v2499 = vadd.f32 %v2495, %v2498
      %vm2500 = vweird.f32 %v2057
      %vm2501 = vweird.f32 %v2495
      %vm2502 = vmor %vm2500, %vm2501
      %v2503 = vsel %vm2502, %v2495, %v2499
      %v2504 = vand.u32 2147483647, %v2057
      %vm2505 = vcmp.eq.f32.partialorder %v2504, 8.507059e+37
      %v2506 = vand.u32 %v2057, 2147483648
      %v2507 = vor.u32 1.1754944e-38, %v2506
      %v2508 = vsel %vm2505, %v2507, %v2503
      %v2509 = vmul.f32 1.0, %v2508
      %v2510 = vrcp.pop %v2058
      %v2511 = vmul.f32 %v2058, %v2510
      %v2512 = vsub.f32 1.0, %v2511
      %v2513 = vmul.f32 %v2510, %v2512
      %v2514 = vadd.f32 %v2510, %v2513
      %vm2515 = vweird.f32 %v2058
      %vm2516 = vweird.f32 %v2510
      %vm2517 = vmor %vm2515, %vm2516
      %v2518 = vsel %vm2517, %v2510, %v2514
      %v2519 = vand.u32 2147483647, %v2058
      %vm2520 = vcmp.eq.f32.partialorder %v2519, 8.507059e+37
      %v2521 = vand.u32 %v2058, 2147483648
      %v2522 = vor.u32 1.1754944e-38, %v2521
      %v2523 = vsel %vm2520, %v2522, %v2518
      %v2524 = vmul.f32 1.0, %v2523
      %v2525 = vrcp.pop %v2059
      %v2526 = vmul.f32 %v2059, %v2525
      %v2527 = vsub.f32 1.0, %v2526
      %v2528 = vmul.f32 %v2525, %v2527
      %v2529 = vadd.f32 %v2525, %v2528
      %vm2530 = vweird.f32 %v2059
      %vm2531 = vweird.f32 %v2525
      %vm2532 = vmor %vm2530, %vm2531
      %v2533 = vsel %vm2532, %v2525, %v2529
      %v2534 = vand.u32 2147483647, %v2059
      %vm2535 = vcmp.eq.f32.partialorder %v2534, 8.507059e+37
      %v2536 = vand.u32 %v2059, 2147483648
      %v2537 = vor.u32 1.1754944e-38, %v2536
      %v2538 = vsel %vm2535, %v2537, %v2533
      %v2539 = vmul.f32 1.0, %v2538
      %vm2540 = vcmask 7168
      %2541 = vst.msk [vmem:[%s338] sm:$0xff] %vm2540, %v2074
      %2542 = vst.msk [vmem:[%s338 + $0x8] sm:$0xff] %vm2540, %v2089
      %2543 = vst.msk [vmem:[%s338 + $0x10] sm:$0xff] %vm2540, %v2104
      %2544 = vst.msk [vmem:[%s338 + $0x18] sm:$0xff] %vm2540, %v2119
      %2545 = vst.msk [vmem:[%s338 + $0x20] sm:$0xff] %vm2540, %v2134
      %2546 = vst.msk [vmem:[%s338 + $0x28] sm:$0xff] %vm2540, %v2149
      %2547 = vst.msk [vmem:[%s338 + $0x30] sm:$0xff] %vm2540, %v2164
      %2548 = vst.msk [vmem:[%s338 + $0x38] sm:$0xff] %vm2540, %v2179
      %2549 = vst.msk [vmem:[%s338 + $0x40] sm:$0xff] %vm2540, %v2194
      %2550 = vst.msk [vmem:[%s338 + $0x48] sm:$0xff] %vm2540, %v2209
      %2551 = vst.msk [vmem:[%s338 + $0x50] sm:$0xff] %vm2540, %v2224
      %2552 = vst.msk [vmem:[%s338 + $0x58] sm:$0xff] %vm2540, %v2239
      %2553 = vst.msk [vmem:[%s338 + $0x60] sm:$0xff] %vm2540, %v2254
      %2554 = vst.msk [vmem:[%s338 + $0x68] sm:$0xff] %vm2540, %v2269
      %2555 = vst.msk [vmem:[%s338 + $0x70] sm:$0xff] %vm2540, %v2284
      %2556 = vst.msk [vmem:[%s338 + $0x78] sm:$0xff] %vm2540, %v2299
      %2557 = vst.msk [vmem:[%s338 + $0x80] sm:$0xff] %vm2540, %v2314
      %2558 = vst.msk [vmem:[%s338 + $0x88] sm:$0xff] %vm2540, %v2329
      %2559 = vst.msk [vmem:[%s338 + $0x90] sm:$0xff] %vm2540, %v2344
      %2560 = vst.msk [vmem:[%s338 + $0x98] sm:$0xff] %vm2540, %v2359
      %2561 = vst.msk [vmem:[%s338 + $0xa0] sm:$0xff] %vm2540, %v2374
      %2562 = vst.msk [vmem:[%s338 + $0xa8] sm:$0xff] %vm2540, %v2389
      %2563 = vst.msk [vmem:[%s338 + $0xb0] sm:$0xff] %vm2540, %v2404
      %2564 = vst.msk [vmem:[%s338 + $0xb8] sm:$0xff] %vm2540, %v2419
      %2565 = vst.msk [vmem:[%s338 + $0xc0] sm:$0xff] %vm2540, %v2434
      %2566 = vst.msk [vmem:[%s338 + $0xc8] sm:$0xff] %vm2540, %v2449
      %2567 = vst.msk [vmem:[%s338 + $0xd0] sm:$0xff] %vm2540, %v2464
      %2568 = vst.msk [vmem:[%s338 + $0xd8] sm:$0xff] %vm2540, %v2479
      %2569 = vst.msk [vmem:[%s338 + $0xe0] sm:$0xff] %vm2540, %v2494
      %2570 = vst.msk [vmem:[%s338 + $0xe8] sm:$0xff] %vm2540, %v2509
      %2571 = vst.msk [vmem:[%s338 + $0xf0] sm:$0xff] %vm2540, %v2524
      %2572 = vst.msk [vmem:[%s338 + $0xf8] sm:$0xff] %vm2540, %v2539
      %s2573 = smul.u32 32, %s21
      %p2574 = scmp.lt.s32.totalorder %s2573, 63
      %s2575 = scalar_select %p2574, %s2573, 63
      %s2576 = smul.addr %s2575, 8
      %s2577 = scalar_lea.vmem %s9, %s2576
      // Predicated region
      $region57: #{tpu_custom_call.1} parent=55 // pred_check
        %p2578 = pneg %p233
      $region58: #{tpu_custom_call.1} parent=55 // pred_check_branch
        %2580 = sbr.rel (%p2578) target = $region60
      $region59: #{tpu_custom_call.1} parent=55 // pred_region
        %s2581 = smul.u32 32, %s21
      $region60: #{tpu_custom_call.1} parent=55 // pred_fallthru
        _
    $region56: #{tpu_custom_call.1} parent=5 // pred_fallthru
      _
    %p2582 = scmp.le.s32.totalorder 2, %s16
    // Predicated region
    $region61: #{tpu_custom_call.1} parent=5 // pred_check
      %p2583 = pneg %p2582
    $region62: #{tpu_custom_call.1} parent=5 // pred_check_branch
      %2585 = sbr.rel (%p2583) target = $region64
    $region63: #{tpu_custom_call.1} parent=5 // pred_region
      %s2586 = ssub.s32 %s16, 2
      // Predicated region
      $region65: #{tpu_custom_call.1} parent=63 // pred_check
        %p2587 = pneg %p239
      $region66: #{tpu_custom_call.1} parent=63 // pred_check_branch
        %2589 = sbr.rel (%p2587) target = $region68
      $region67: #{tpu_custom_call.1} parent=63 // pred_region
        %s2590 = smul.u32 32, %s22
        %p2591 = scmp.lt.s32.totalorder %s2590, 63
        %s2592 = scalar_select %p2591, %s2590, 63
        %s2593 = smul.addr %s2592, 8
        %s2594 = scalar_lea.vmem %s9, %s2593
      $region68: #{tpu_custom_call.1} parent=63 // pred_fallthru
        _
    $region64: #{tpu_custom_call.1} parent=5 // pred_fallthru
      _
  $region6: #{tpu_custom_call.1} parent=0 // loop_footer
    %s20 = sadd.s32 1, %s16
  $region7: #{tpu_custom_call.1} parent=0 // loop_footer_branch
    %15 = sbr.rel target = $region3
  $region8: #{tpu_custom_call.1} parent=0 // loop_exit
    _

</llo_original>
